<compile_context>
chip_gen: v6e
topology: v6e:2x2x1
jax: 0.10.0
libtpu: 0.0.40
codegen_flags: <defaults>
</compile_context>

<pallas_src>
import functools

import jax
import jax.numpy as jnp
from jax.experimental import pallas as pl
from jax.experimental.pallas import tpu as pltpu

EPS = 1e-5  # torch.nn.LayerNorm default eps


def _gelu_tanh(x):
    # tanh-approx GELU (EUP-friendly); used identically in kernel and reference.
    return 0.5 * x * (1.0 + jnp.tanh(0.7978845608028654 * (x + 0.044715 * x * x * x)))


def _ln(x, g, b):
    # One-pass LayerNorm statistics: var = E[x^2] - mean^2 (clamped >= 0).
    mean = jnp.mean(x, axis=-1, keepdims=True)
    msq = jnp.mean(x * x, axis=-1, keepdims=True)
    var = jnp.maximum(msq - mean * mean, 0.0)
    return (x - mean) * jax.lax.rsqrt(var + EPS) * g + b


# ----------------------------- Pallas kernels ------------------------------

def _layer_norm_kernel(x_ref, g_ref, b_ref, o_ref):
    # Per-row LayerNorm over the last (lane) dimension, tiled over rows.
    o_ref[...] = _ln(x_ref[...], g_ref[...], b_ref[...])


def _prenorm_ff_kernel(x_ref, g_ref, b_ref, w1_ref, b1_ref, w2_ref, b2_ref, o_ref):
    # Fused PreNorm(dim, FeedForward): LN -> Linear -> GELU -> Linear in one
    # kernel, so the normalized activations never round-trip HBM.
    xn = _ln(x_ref[...], g_ref[...], b_ref[...])
    h = jnp.dot(xn.astype(jnp.bfloat16), w1_ref[...],
                preferred_element_type=jnp.float32) + b1_ref[...]
    h = _gelu_tanh(h)  # f32 VPU/EUP math (portable to v5e)
    o_ref[...] = jnp.dot(h.astype(jnp.bfloat16), w2_ref[...],
                         preferred_element_type=jnp.float32) + b2_ref[...]


# ------------------------------ tiling helpers ------------------------------

def _row_tile(M_pad, widest, *, min_steps=8, budget_bytes=4 << 20):
    """Row tile: multiple of 8, divides M_pad, gives >= min_steps grid steps
    when possible, and keeps tm * widest * 4B within a small VMEM budget."""
    cap_budget = max(8, (budget_bytes // (widest * 4)) // 8 * 8)
    cap_steps = max(8, (M_pad // min_steps) // 8 * 8)
    tm = min(M_pad, cap_budget, cap_steps, 1024)
    tm = max(8, tm - tm % 8)
    while M_pad % tm:
        tm -= 8
    return tm


def _vmem_limit_bytes(tm, dim, hidden, single_buffer_weights):
    """Generation-aware VMEM limit with headroom."""
    try:
        cap = int(pltpu.get_tpu_info().vmem_capacity_bytes)
    except Exception:  # not queryable -> conservative v7x-sized default
        cap = 64 << 20
    act = 2 * 2 * tm * dim * 4                      # double-buffered x/out row tiles
    hid = tm * hidden * 4                           # intermediate h (f32)
    wbuf = 1 if single_buffer_weights else 2
    weights = wbuf * (2 * dim * hidden * 2 + (3 * dim + hidden) * 4)  # bf16 weights
    est = act + hid + weights + (2 << 20)           # + compiler scratch headroom
    return int(min(int(cap * 0.85), max(16 << 20, 2 * est)))


def _pad_rows(xf, M):
    M_pad = -(-M // 8) * 8
    if M_pad != M:
        xf = jnp.pad(xf, ((0, M_pad - M), (0, 0)))
    return xf, M_pad


# -------------------------------- wrappers ----------------------------------

def layer_norm(x, gamma, beta):
    """Pallas LayerNorm over the last dim (torch.nn.LayerNorm(dim) forward)."""
    orig_shape = x.shape
    dim = orig_shape[-1]
    M = x.size // dim
    xf, M_pad = _pad_rows(x.reshape(M, dim).astype(jnp.float32), M)
    tm = _row_tile(M_pad, dim)
    out = pl.pallas_call(
        _layer_norm_kernel,
        out_shape=jax.ShapeDtypeStruct((M_pad, dim), jnp.float32),
        grid=(M_pad // tm,),
        in_specs=[
            pl.BlockSpec((tm, dim), lambda i: (i, 0)),
            pl.BlockSpec((1, dim), lambda i: (0, 0)),
            pl.BlockSpec((1, dim), lambda i: (0, 0)),
        ],
        out_specs=pl.BlockSpec((tm, dim), lambda i: (i, 0)),
        compiler_params=pltpu.CompilerParams(
            dimension_semantics=("parallel",),
            vmem_limit_bytes=_vmem_limit_bytes(tm, dim, dim, True),
        ),
    )(xf, gamma.reshape(1, dim).astype(jnp.float32),
      beta.reshape(1, dim).astype(jnp.float32))
    return out[:M].reshape(orig_shape)


def pre_norm(x, gamma, beta, fn, **kwargs):
    """PreNorm.forward: fn(LayerNorm(x), **kwargs).  `fn` is any JAX callable."""
    # TODO(synk): `fn` is an arbitrary wrapped nn.Module in PyTorch; a generic
    #             module cannot be lowered here, so `fn` is any JAX callable.
    return fn(layer_norm(x, gamma, beta), **kwargs)


def pre_norm_feedforward(x, params, *, single_buffer_weights=True):
    """Fused PreNorm(dim, FeedForward) — single pallas_call, no HBM round-trip
    for the normalized activations or the hidden layer."""
    gamma, beta = params["ln_g"], params["ln_b"]
    w1 = params["w1"].astype(jnp.bfloat16)   # bf16 MXU operands
    w2 = params["w2"].astype(jnp.bfloat16)
    b1, b2 = params["b1"], params["b2"]
    orig_shape = x.shape
    dim = orig_shape[-1]
    hidden = w1.shape[1]
    M = x.size // dim
    xf, M_pad = _pad_rows(x.reshape(M, dim).astype(jnp.float32), M)
    tm = _row_tile(M_pad, max(dim, hidden))

    def resident(shape):
        kw = {}
        if single_buffer_weights:
            kw["pipeline_mode"] = pl.Buffered(1)   # constant index_map: never re-DMAs
        return pl.BlockSpec(shape, lambda i: (0,) * len(shape), **kw)

    cost = pl.CostEstimate(
        flops=4 * M_pad * dim * hidden,
        transcendentals=M_pad * hidden,
        bytes_accessed=M_pad * dim * 8 + 2 * dim * hidden * 2 + (3 * dim + hidden) * 4,
    )

    out = pl.pallas_call(
        _prenorm_ff_kernel,
        out_shape=jax.ShapeDtypeStruct((M_pad, dim), jnp.float32),
        grid=(M_pad // tm,),
        in_specs=[
            pl.BlockSpec((tm, dim), lambda i: (i, 0)),   # x row tile (pipelined)
            resident((1, dim)),                          # ln gamma   (resident)
            resident((1, dim)),                          # ln beta
            resident((dim, hidden)),                     # w1 (bf16,  resident)
            resident((1, hidden)),                       # b1
            resident((hidden, dim)),                     # w2 (bf16,  resident)
            resident((1, dim)),                          # b2
        ],
        out_specs=pl.BlockSpec((tm, dim), lambda i: (i, 0)),
        compiler_params=pltpu.CompilerParams(
            dimension_semantics=("parallel",),
            vmem_limit_bytes=_vmem_limit_bytes(tm, dim, hidden, single_buffer_weights),
        ),
        cost_estimate=cost,
    )(xf,
      gamma.reshape(1, dim).astype(jnp.float32),
      beta.reshape(1, dim).astype(jnp.float32),
      w1, b1.reshape(1, hidden).astype(jnp.float32),
      w2, b2.reshape(1, dim).astype(jnp.float32))
    return out[:M].reshape(orig_shape)


# --------------------------- pure-JAX reference ------------------------------

def ref_layer_norm(x, gamma, beta):
    m = jnp.mean(x, axis=-1, keepdims=True)
    v = jnp.mean((x - m) ** 2, axis=-1, keepdims=True)
    return (x - m) * jax.lax.rsqrt(v + EPS) * gamma + beta


def ref_feedforward(x, params):
    h = _gelu_tanh(x @ params["w1"] + params["b1"])
    return h @ params["w2"] + params["b2"]


# ----------------------------------- main ------------------------------------

if __name__ == "__main__":
    # Small transformer-style shapes: (batch, seq, dim).  dim / hidden are
    # multiples of 128 so every store is a full-lane (unmasked) vst, and
    # M=128 with tm=16 gives an 8-step pipelined / megacore-shardable grid.
    B, S, DIM, HID = 2, 64, 128, 256
    key = jax.random.PRNGKey(0)
    k_x, k_g, k_b, k_w1, k_w2 = jax.random.split(key, 5)
    x = jax.random.normal(k_x, (B, S, DIM), jnp.float32)
    params = {
        "ln_g": 1.0 + 0.1 * jax.random.normal(k_g, (DIM,), jnp.float32),
        "ln_b": 0.1 * jax.random.normal(k_b, (DIM,), jnp.float32),
        "w1": 0.05 * jax.random.normal(k_w1, (DIM, HID), jnp.float32),
        "b1": jnp.full((HID,), 0.01, jnp.float32),
        "w2": 0.05 * jax.random.normal(k_w2, (HID, DIM), jnp.float32),
        "b2": jnp.full((DIM,), -0.01, jnp.float32),
    }

    # Fused path: PreNorm(dim, FeedForward) as one Pallas kernel.
    fused_sb = jax.jit(functools.partial(pre_norm_feedforward,
                                         single_buffer_weights=True))
    try:
        out_fused = jax.block_until_ready(fused_sb(x, params))
    except Exception:
        # Fallback if this platform/jax build rejects pl.Buffered(1).
        fused_db = jax.jit(functools.partial(pre_norm_feedforward,
                                             single_buffer_weights=False))
        out_fused = jax.block_until_ready(fused_db(x, params))

    # Generic path (exactly PreNorm.forward): Pallas LayerNorm, then arbitrary fn.
    fn = lambda y: ref_feedforward(y, params)
    out_composed = jax.block_until_ready(
        jax.jit(lambda xx: pre_norm(xx, params["ln_g"], params["ln_b"], fn))(x))

    # Standalone Pallas LayerNorm check.
    out_ln = jax.block_until_ready(
        jax.jit(layer_norm)(x, params["ln_g"], params["ln_b"]))

    ref_ln = ref_layer_norm(x, params["ln_g"], params["ln_b"])
    ref = ref_feedforward(ref_ln, params)

    assert out_fused.shape == (B, S, DIM), out_fused.shape
    assert jnp.allclose(out_ln, ref_ln, atol=1e-4, rtol=1e-4), float(
        jnp.max(jnp.abs(out_ln - ref_ln)))
    # Composed path is all-f32: tight tolerance.
    assert jnp.allclose(out_composed, ref, atol=1e-3, rtol=1e-3), float(
        jnp.max(jnp.abs(out_composed - ref)))
    # Fused path uses bf16 MXU operands: slightly looser tolerance vs f32 ref.
    assert jnp.allclose(out_fused, ref, atol=2e-2, rtol=2e-2), float(
        jnp.max(jnp.abs(out_fused - ref)))

    print("KERNEL_OK")
</pallas_src>

<mosaic_0001>
module attributes {stable_mosaic.version = 11 : i64} {
  func.func @_prenorm_ff_kernel(%arg0: i32, %arg1: memref<16x128xf32, #tpu.memory_space<vmem>>, %arg2: memref<1x128xf32, #tpu.memory_space<vmem>>, %arg3: memref<1x128xf32, #tpu.memory_space<vmem>>, %arg4: memref<128x256xbf16, #tpu.memory_space<vmem>>, %arg5: memref<1x256xf32, #tpu.memory_space<vmem>>, %arg6: memref<256x128xbf16, #tpu.memory_space<vmem>>, %arg7: memref<1x128xf32, #tpu.memory_space<vmem>>, %arg8: memref<16x128xf32, #tpu.memory_space<vmem>>) attributes {dimension_semantics = [#tpu.dimension_semantics<parallel>], iteration_bounds = array<i64: 8>, scalar_prefetch = 0 : i64, scratch_operands = 0 : i64, tpu.core_type = #tpu.core_type<tc>, window_params = [{transform_indices = @transform_0, window_bounds = array<i64: 16, 128>}, {pipeline_mode = #tpu.pipeline_mode<synchronous>, transform_indices = @transform_1, window_bounds = array<i64: 1, 128>}, {pipeline_mode = #tpu.pipeline_mode<synchronous>, transform_indices = @transform_2, window_bounds = array<i64: 1, 128>}, {pipeline_mode = #tpu.pipeline_mode<synchronous>, transform_indices = @transform_3, window_bounds = array<i64: 128, 256>}, {pipeline_mode = #tpu.pipeline_mode<synchronous>, transform_indices = @transform_4, window_bounds = array<i64: 1, 256>}, {pipeline_mode = #tpu.pipeline_mode<synchronous>, transform_indices = @transform_5, window_bounds = array<i64: 256, 128>}, {pipeline_mode = #tpu.pipeline_mode<synchronous>, transform_indices = @transform_6, window_bounds = array<i64: 1, 128>}, {transform_indices = @transform_7, window_bounds = array<i64: 16, 128>}]} {
    %c0 = arith.constant 0 : index
    %c0_0 = arith.constant 0 : index
    %0 = vector.load %arg1[%c0, %c0_0] : memref<16x128xf32, #tpu.memory_space<vmem>>, vector<16x128xf32>
    %c0_1 = arith.constant 0 : index
    %c0_2 = arith.constant 0 : index
    %1 = vector.load %arg2[%c0_1, %c0_2] : memref<1x128xf32, #tpu.memory_space<vmem>>, vector<1x128xf32>
    %c0_3 = arith.constant 0 : index
    %c0_4 = arith.constant 0 : index
    %2 = vector.load %arg3[%c0_3, %c0_4] : memref<1x128xf32, #tpu.memory_space<vmem>>, vector<1x128xf32>
    %cst = arith.constant dense<0.000000e+00> : vector<16xf32>
    %3 = vector.multi_reduction <add>, %0, %cst [1] : vector<16x128xf32> to vector<16xf32>
    %4 = vector.shape_cast %3 : vector<16xf32> to vector<16x1xf32>
    %cst_5 = arith.constant 1.280000e+02 : f32
    %5 = vector.broadcast %cst_5 : f32 to vector<16x1xf32>
    %6 = arith.divf %4, %5 : vector<16x1xf32>
    %7 = arith.mulf %0, %0 : vector<16x128xf32>
    %cst_6 = arith.constant dense<0.000000e+00> : vector<16xf32>
    %8 = vector.multi_reduction <add>, %7, %cst_6 [1] : vector<16x128xf32> to vector<16xf32>
    %9 = vector.shape_cast %8 : vector<16xf32> to vector<16x1xf32>
    %cst_7 = arith.constant 1.280000e+02 : f32
    %10 = vector.broadcast %cst_7 : f32 to vector<16x1xf32>
    %11 = arith.divf %9, %10 : vector<16x1xf32>
    %12 = arith.mulf %6, %6 : vector<16x1xf32>
    %13 = arith.subf %11, %12 : vector<16x1xf32>
    %cst_8 = arith.constant 0.000000e+00 : f32
    %14 = vector.broadcast %cst_8 : f32 to vector<16x1xf32>
    %15 = arith.maximumf %13, %14 : vector<16x1xf32>
    %16 = vector.broadcast %6 : vector<16x1xf32> to vector<16x128xf32>
    %17 = arith.subf %0, %16 : vector<16x128xf32>
    %cst_9 = arith.constant 9.99999974E-6 : f32
    %18 = vector.broadcast %cst_9 : f32 to vector<16x1xf32>
    %19 = arith.addf %15, %18 : vector<16x1xf32>
    %20 = math.rsqrt %19 : vector<16x1xf32>
    %21 = vector.broadcast %20 : vector<16x1xf32> to vector<16x128xf32>
    %22 = arith.mulf %17, %21 : vector<16x128xf32>
    %23 = vector.broadcast %1 : vector<1x128xf32> to vector<16x128xf32>
    %24 = arith.mulf %22, %23 : vector<16x128xf32>
    %25 = vector.broadcast %2 : vector<1x128xf32> to vector<16x128xf32>
    %26 = arith.addf %24, %25 : vector<16x128xf32>
    %27 = arith.truncf %26 : vector<16x128xf32> to vector<16x128xbf16>
    %c0_10 = arith.constant 0 : index
    %c0_11 = arith.constant 0 : index
    %28 = vector.load %arg4[%c0_10, %c0_11] : memref<128x256xbf16, #tpu.memory_space<vmem>>, vector<128x256xbf16>
    %cst_12 = arith.constant dense<0.000000e+00> : vector<16x256xf32>
    %29 = tpu.matmul %27, %28, %cst_12 {dimension_numbers = #tpu.dot_dimension_numbers<[1], [0], [0], [1], [0, 0, 1, 1], [], []>} : vector<16x128xbf16>, vector<128x256xbf16>, vector<16x256xf32> -> vector<16x256xf32>
    %c0_13 = arith.constant 0 : index
    %c0_14 = arith.constant 0 : index
    %30 = vector.load %arg5[%c0_13, %c0_14] : memref<1x256xf32, #tpu.memory_space<vmem>>, vector<1x256xf32>
    %31 = vector.broadcast %30 : vector<1x256xf32> to vector<16x256xf32>
    %32 = arith.addf %29, %31 : vector<16x256xf32>
    %cst_15 = arith.constant 5.000000e-01 : f32
    %33 = vector.broadcast %cst_15 : f32 to vector<16x256xf32>
    %34 = arith.mulf %33, %32 : vector<16x256xf32>
    %cst_16 = arith.constant 4.471500e-02 : f32
    %35 = vector.broadcast %cst_16 : f32 to vector<16x256xf32>
    %36 = arith.mulf %35, %32 : vector<16x256xf32>
    %37 = arith.mulf %36, %32 : vector<16x256xf32>
    %38 = arith.mulf %37, %32 : vector<16x256xf32>
    %39 = arith.addf %32, %38 : vector<16x256xf32>
    %cst_17 = arith.constant 0.797884583 : f32
    %40 = vector.broadcast %cst_17 : f32 to vector<16x256xf32>
    %41 = arith.mulf %40, %39 : vector<16x256xf32>
    %42 = math.tanh %41 : vector<16x256xf32>
    %cst_18 = arith.constant 1.000000e+00 : f32
    %43 = vector.broadcast %cst_18 : f32 to vector<16x256xf32>
    %44 = arith.addf %43, %42 : vector<16x256xf32>
    %45 = arith.mulf %34, %44 : vector<16x256xf32>
    %46 = arith.truncf %45 : vector<16x256xf32> to vector<16x256xbf16>
    %c0_19 = arith.constant 0 : index
    %c0_20 = arith.constant 0 : index
    %47 = vector.load %arg6[%c0_19, %c0_20] : memref<256x128xbf16, #tpu.memory_space<vmem>>, vector<256x128xbf16>
    %cst_21 = arith.constant dense<0.000000e+00> : vector<16x128xf32>
    %48 = tpu.matmul %46, %47, %cst_21 {dimension_numbers = #tpu.dot_dimension_numbers<[1], [0], [0], [1], [0, 0, 1, 1], [], []>} : vector<16x256xbf16>, vector<256x128xbf16>, vector<16x128xf32> -> vector<16x128xf32>
    %c0_22 = arith.constant 0 : index
    %c0_23 = arith.constant 0 : index
    %49 = vector.load %arg7[%c0_22, %c0_23] : memref<1x128xf32, #tpu.memory_space<vmem>>, vector<1x128xf32>
    %50 = vector.broadcast %49 : vector<1x128xf32> to vector<16x128xf32>
    %51 = arith.addf %48, %50 : vector<16x128xf32>
    %c0_24 = arith.constant 0 : index
    %c0_25 = arith.constant 0 : index
    %52 = vector.load %arg8[%c0_24, %c0_25] : memref<16x128xf32, #tpu.memory_space<vmem>>, vector<16x128xf32>
    tpu.vector_store %arg8[%c0_24, %c0_25], %51 {strides = array<i32>} : memref<16x128xf32, #tpu.memory_space<vmem>>, vector<16x128xf32>,
    return
  }
  func.func @transform_0(%arg0: i32) -> (i32, i32) {
    %c0_i32 = arith.constant 0 : i32
    %c0_i32_0 = arith.constant 0 : i32
    return %arg0, %c0_i32 : i32, i32
  }
  func.func @transform_1(%arg0: i32) -> (i32, i32) {
    %c0_i32 = arith.constant 0 : i32
    %c0_i32_0 = arith.constant 0 : i32
    %c0_i32_1 = arith.constant 0 : i32
    return %c0_i32, %c0_i32_0 : i32, i32
  }
  func.func @transform_2(%arg0: i32) -> (i32, i32) {
    %c0_i32 = arith.constant 0 : i32
    %c0_i32_0 = arith.constant 0 : i32
    %c0_i32_1 = arith.constant 0 : i32
    return %c0_i32, %c0_i32_0 : i32, i32
  }
  func.func @transform_3(%arg0: i32) -> (i32, i32) {
    %c0_i32 = arith.constant 0 : i32
    %c0_i32_0 = arith.constant 0 : i32
    %c0_i32_1 = arith.constant 0 : i32
    return %c0_i32, %c0_i32_0 : i32, i32
  }
  func.func @transform_4(%arg0: i32) -> (i32, i32) {
    %c0_i32 = arith.constant 0 : i32
    %c0_i32_0 = arith.constant 0 : i32
    %c0_i32_1 = arith.constant 0 : i32
    return %c0_i32, %c0_i32_0 : i32, i32
  }
  func.func @transform_5(%arg0: i32) -> (i32, i32) {
    %c0_i32 = arith.constant 0 : i32
    %c0_i32_0 = arith.constant 0 : i32
    %c0_i32_1 = arith.constant 0 : i32
    return %c0_i32, %c0_i32_0 : i32, i32
  }
  func.func @transform_6(%arg0: i32) -> (i32, i32) {
    %c0_i32 = arith.constant 0 : i32
    %c0_i32_0 = arith.constant 0 : i32
    %c0_i32_1 = arith.constant 0 : i32
    return %c0_i32, %c0_i32_0 : i32, i32
  }
  func.func @transform_7(%arg0: i32) -> (i32, i32) {
    %c0_i32 = arith.constant 0 : i32
    %c0_i32_0 = arith.constant 0 : i32
    return %arg0, %c0_i32 : i32, i32
  }
}

module attributes {stable_mosaic.version = 11 : i64} {
  func.func @_prenorm_ff_kernel(%arg0: i32, %arg1: memref<16x128xf32, #tpu.memory_space<vmem>>, %arg2: memref<1x128xf32, #tpu.memory_space<vmem>>, %arg3: memref<1x128xf32, #tpu.memory_space<vmem>>, %arg4: memref<128x256xbf16, #tpu.memory_space<vmem>>, %arg5: memref<1x256xf32, #tpu.memory_space<vmem>>, %arg6: memref<256x128xbf16, #tpu.memory_space<vmem>>, %arg7: memref<1x128xf32, #tpu.memory_space<vmem>>, %arg8: memref<16x128xf32, #tpu.memory_space<vmem>>) attributes {dimension_semantics = [#tpu.dimension_semantics<parallel>], iteration_bounds = array<i64: 8>, scalar_prefetch = 0 : i64, scratch_operands = 0 : i64, tpu.core_type = #tpu.core_type<tc>, window_params = [{transform_indices = @transform_0, window_bounds = array<i64: 16, 128>}, {pipeline_mode = #tpu.pipeline_mode<synchronous>, transform_indices = @transform_1, window_bounds = array<i64: 1, 128>}, {pipeline_mode = #tpu.pipeline_mode<synchronous>, transform_indices = @transform_2, window_bounds = array<i64: 1, 128>}, {pipeline_mode = #tpu.pipeline_mode<synchronous>, transform_indices = @transform_3, window_bounds = array<i64: 128, 256>}, {pipeline_mode = #tpu.pipeline_mode<synchronous>, transform_indices = @transform_4, window_bounds = array<i64: 1, 256>}, {pipeline_mode = #tpu.pipeline_mode<synchronous>, transform_indices = @transform_5, window_bounds = array<i64: 256, 128>}, {pipeline_mode = #tpu.pipeline_mode<synchronous>, transform_indices = @transform_6, window_bounds = array<i64: 1, 128>}, {transform_indices = @transform_7, window_bounds = array<i64: 16, 128>}]} {
    %c0 = arith.constant 0 : index
    %c0_0 = arith.constant 0 : index
    %0 = vector.load %arg1[%c0, %c0_0] : memref<16x128xf32, #tpu.memory_space<vmem>>, vector<16x128xf32>
    %c0_1 = arith.constant 0 : index
    %c0_2 = arith.constant 0 : index
    %1 = vector.load %arg2[%c0_1, %c0_2] : memref<1x128xf32, #tpu.memory_space<vmem>>, vector<1x128xf32>
    %c0_3 = arith.constant 0 : index
    %c0_4 = arith.constant 0 : index
    %2 = vector.load %arg3[%c0_3, %c0_4] : memref<1x128xf32, #tpu.memory_space<vmem>>, vector<1x128xf32>
    %cst = arith.constant dense<0.000000e+00> : vector<16xf32>
    %3 = vector.multi_reduction <add>, %0, %cst [1] : vector<16x128xf32> to vector<16xf32>
    %4 = vector.shape_cast %3 : vector<16xf32> to vector<16x1xf32>
    %cst_5 = arith.constant 1.280000e+02 : f32
    %5 = vector.broadcast %cst_5 : f32 to vector<16x1xf32>
    %6 = arith.divf %4, %5 : vector<16x1xf32>
    %7 = arith.mulf %0, %0 : vector<16x128xf32>
    %cst_6 = arith.constant dense<0.000000e+00> : vector<16xf32>
    %8 = vector.multi_reduction <add>, %7, %cst_6 [1] : vector<16x128xf32> to vector<16xf32>
    %9 = vector.shape_cast %8 : vector<16xf32> to vector<16x1xf32>
    %cst_7 = arith.constant 1.280000e+02 : f32
    %10 = vector.broadcast %cst_7 : f32 to vector<16x1xf32>
    %11 = arith.divf %9, %10 : vector<16x1xf32>
    %12 = arith.mulf %6, %6 : vector<16x1xf32>
    %13 = arith.subf %11, %12 : vector<16x1xf32>
    %cst_8 = arith.constant 0.000000e+00 : f32
    %14 = vector.broadcast %cst_8 : f32 to vector<16x1xf32>
    %15 = arith.maximumf %13, %14 : vector<16x1xf32>
    %16 = vector.broadcast %6 : vector<16x1xf32> to vector<16x128xf32>
    %17 = arith.subf %0, %16 : vector<16x128xf32>
    %cst_9 = arith.constant 9.99999974E-6 : f32
    %18 = vector.broadcast %cst_9 : f32 to vector<16x1xf32>
    %19 = arith.addf %15, %18 : vector<16x1xf32>
    %20 = math.rsqrt %19 : vector<16x1xf32>
    %21 = vector.broadcast %20 : vector<16x1xf32> to vector<16x128xf32>
    %22 = arith.mulf %17, %21 : vector<16x128xf32>
    %23 = vector.broadcast %1 : vector<1x128xf32> to vector<16x128xf32>
    %24 = arith.mulf %22, %23 : vector<16x128xf32>
    %25 = vector.broadcast %2 : vector<1x128xf32> to vector<16x128xf32>
    %26 = arith.addf %24, %25 : vector<16x128xf32>
    %27 = arith.truncf %26 : vector<16x128xf32> to vector<16x128xbf16>
    %c0_10 = arith.constant 0 : index
    %c0_11 = arith.constant 0 : index
    %28 = vector.load %arg4[%c0_10, %c0_11] : memref<128x256xbf16, #tpu.memory_space<vmem>>, vector<128x256xbf16>
    %cst_12 = arith.constant dense<0.000000e+00> : vector<16x256xf32>
    %29 = tpu.matmul %27, %28, %cst_12 {dimension_numbers = #tpu.dot_dimension_numbers<[1], [0], [0], [1], [0, 0, 1, 1], [], []>} : vector<16x128xbf16>, vector<128x256xbf16>, vector<16x256xf32> -> vector<16x256xf32>
    %c0_13 = arith.constant 0 : index
    %c0_14 = arith.constant 0 : index
    %30 = vector.load %arg5[%c0_13, %c0_14] : memref<1x256xf32, #tpu.memory_space<vmem>>, vector<1x256xf32>
    %31 = vector.broadcast %30 : vector<1x256xf32> to vector<16x256xf32>
    %32 = arith.addf %29, %31 : vector<16x256xf32>
    %cst_15 = arith.constant 5.000000e-01 : f32
    %33 = vector.broadcast %cst_15 : f32 to vector<16x256xf32>
    %34 = arith.mulf %33, %32 : vector<16x256xf32>
    %cst_16 = arith.constant 4.471500e-02 : f32
    %35 = vector.broadcast %cst_16 : f32 to vector<16x256xf32>
    %36 = arith.mulf %35, %32 : vector<16x256xf32>
    %37 = arith.mulf %36, %32 : vector<16x256xf32>
    %38 = arith.mulf %37, %32 : vector<16x256xf32>
    %39 = arith.addf %32, %38 : vector<16x256xf32>
    %cst_17 = arith.constant 0.797884583 : f32
    %40 = vector.broadcast %cst_17 : f32 to vector<16x256xf32>
    %41 = arith.mulf %40, %39 : vector<16x256xf32>
    %42 = math.tanh %41 : vector<16x256xf32>
    %cst_18 = arith.constant 1.000000e+00 : f32
    %43 = vector.broadcast %cst_18 : f32 to vector<16x256xf32>
    %44 = arith.addf %43, %42 : vector<16x256xf32>
    %45 = arith.mulf %34, %44 : vector<16x256xf32>
    %46 = arith.truncf %45 : vector<16x256xf32> to vector<16x256xbf16>
    %c0_19 = arith.constant 0 : index
    %c0_20 = arith.constant 0 : index
    %47 = vector.load %arg6[%c0_19, %c0_20] : memref<256x128xbf16, #tpu.memory_space<vmem>>, vector<256x128xbf16>
    %cst_21 = arith.constant dense<0.000000e+00> : vector<16x128xf32>
    %48 = tpu.matmul %46, %47, %cst_21 {dimension_numbers = #tpu.dot_dimension_numbers<[1], [0], [0], [1], [0, 0, 1, 1], [], []>} : vector<16x256xbf16>, vector<256x128xbf16>, vector<16x128xf32> -> vector<16x128xf32>
    %c0_22 = arith.constant 0 : index
    %c0_23 = arith.constant 0 : index
    %49 = vector.load %arg7[%c0_22, %c0_23] : memref<1x128xf32, #tpu.memory_space<vmem>>, vector<1x128xf32>
    %50 = vector.broadcast %49 : vector<1x128xf32> to vector<16x128xf32>
    %51 = arith.addf %48, %50 : vector<16x128xf32>
    %c0_24 = arith.constant 0 : index
    %c0_25 = arith.constant 0 : index
    %52 = vector.load %arg8[%c0_24, %c0_25] : memref<16x128xf32, #tpu.memory_space<vmem>>, vector<16x128xf32>
    tpu.vector_store %arg8[%c0_24, %c0_25], %51 {strides = array<i32>} : memref<16x128xf32, #tpu.memory_space<vmem>>, vector<16x128xf32>,
    return
  }
  func.func @transform_0(%arg0: i32) -> (i32, i32) {
    %c0_i32 = arith.constant 0 : i32
    %c0_i32_0 = arith.constant 0 : i32
    return %arg0, %c0_i32 : i32, i32
  }
  func.func @transform_1(%arg0: i32) -> (i32, i32) {
    %c0_i32 = arith.constant 0 : i32
    %c0_i32_0 = arith.constant 0 : i32
    %c0_i32_1 = arith.constant 0 : i32
    return %c0_i32, %c0_i32_0 : i32, i32
  }
  func.func @transform_2(%arg0: i32) -> (i32, i32) {
    %c0_i32 = arith.constant 0 : i32
    %c0_i32_0 = arith.constant 0 : i32
    %c0_i32_1 = arith.constant 0 : i32
    return %c0_i32, %c0_i32_0 : i32, i32
  }
  func.func @transform_3(%arg0: i32) -> (i32, i32) {
    %c0_i32 = arith.constant 0 : i32
    %c0_i32_0 = arith.constant 0 : i32
    %c0_i32_1 = arith.constant 0 : i32
    return %c0_i32, %c0_i32_0 : i32, i32
  }
  func.func @transform_4(%arg0: i32) -> (i32, i32) {
    %c0_i32 = arith.constant 0 : i32
    %c0_i32_0 = arith.constant 0 : i32
    %c0_i32_1 = arith.constant 0 : i32
    return %c0_i32, %c0_i32_0 : i32, i32
  }
  func.func @transform_5(%arg0: i32) -> (i32, i32) {
    %c0_i32 = arith.constant 0 : i32
    %c0_i32_0 = arith.constant 0 : i32
    %c0_i32_1 = arith.constant 0 : i32
    return %c0_i32, %c0_i32_0 : i32, i32
  }
  func.func @transform_6(%arg0: i32) -> (i32, i32) {
    %c0_i32 = arith.constant 0 : i32
    %c0_i32_0 = arith.constant 0 : i32
    %c0_i32_1 = arith.constant 0 : i32
    return %c0_i32, %c0_i32_0 : i32, i32
  }
  func.func @transform_7(%arg0: i32) -> (i32, i32) {
    %c0_i32 = arith.constant 0 : i32
    %c0_i32_0 = arith.constant 0 : i32
    return %arg0, %c0_i32 : i32, i32
  }
}

</mosaic_0001>

<llo_original>
// kernel: pre_norm_feedforward.1
$region0: #{pre_norm_feedforward.1}
  #allocation0 [shape = 'u32[]', space=smem, size = 0x4, offset = 0x4, fixed_abs, tag = 'smem constant byte address 0x4 - core index']
  #allocation1 [shape = 'u32[144,128]{1,0:T(1,128)}', space=vmem, size = 0x12000, scoped, tag = 'internal scratch']
  %s0 = inlined_call_operand.vmem [shape: f32[128,128], index: 0, kind: input, shape index: {}]
  %s1 = inlined_call_operand.vmem [shape: f32[1,128], index: 1, kind: input, shape index: {}]
  %s2 = inlined_call_operand.vmem [shape: f32[1,128], index: 2, kind: input, shape index: {}]
  %s3 = inlined_call_operand.vmem [shape: bf16[128,256], index: 3, kind: input, shape index: {}]
  %s4 = inlined_call_operand.vmem [shape: f32[1,256], index: 4, kind: input, shape index: {}]
  %s5 = inlined_call_operand.vmem [shape: bf16[256,128], index: 5, kind: input, shape index: {}]
  %s6 = inlined_call_operand.vmem [shape: f32[1,128], index: 6, kind: input, shape index: {}]
  %s7 = inlined_call_operand.hbm [shape: f32[128,128], index: 7, kind: output, shape index: {}]
  %s8 = sld [smem:[#allocation0]]
  $region61: #{pre_norm_feedforward.1} parent=0
    _
  %s10 = ssub.s32 1, %s8
  %s11 = scalar_select 0, %s10, %s8
  $region1: #{pre_norm_feedforward.1} parent=0
    #allocation2 [shape = 'u8[16384]{0}', space=vmem, size = 0x4000, scoped, tag = 'output window, operand 0']
    #allocation3 [shape = 's32[2]{0}', space=sflag, size = 0x8, scoped, tag = 'scoped memory for pre_norm_feedforward.1']
    %12 = vsyncpa [#allocation3], 0
    %s13 = scalar_lea.sflag [#allocation3], 1
    %14 = vsyncpa %s13, 0
    loop: start=0, step=1, limit=10
    $region2: #{pre_norm_feedforward.1} parent=1 // loop_pre_header
      _
    $region3: #{pre_norm_feedforward.1} parent=1 // loop_header
      %s16 = sphi 0, %s20
      %p17 = scmp.ge.s32.totalorder %s16, 10
      %s26 = sphi 0, %s28
      %s29 = sphi 0, %s26
      %s30 = sphi 0, %s29
      %s46 = sphi 0, %s30
      %s50 = sphi 0, %s50
      %s52 = sphi 0, %s50
      %s53 = sphi 0, %s52
      %s67 = sphi 0, %s53
      %s71 = sphi 0, %s71
      %s73 = sphi 0, %s71
      %s74 = sphi 0, %s73
      %s88 = sphi 0, %s74
      %s92 = sphi 0, %s92
      %s94 = sphi 0, %s92
      %s95 = sphi 0, %s94
      %s109 = sphi 0, %s95
      %s113 = sphi 0, %s113
      %s115 = sphi 0, %s113
      %s116 = sphi 0, %s115
      %s130 = sphi 0, %s116
      %s134 = sphi 0, %s134
      %s136 = sphi 0, %s134
      %s137 = sphi 0, %s136
      %s151 = sphi 0, %s137
      %s155 = sphi 0, %s155
      %s157 = sphi 0, %s155
      %s158 = sphi 0, %s157
      %s172 = sphi 0, %s158
      %s178 = sphi 0, %s180
      %s181 = sphi 0, %s178
      %s182 = sphi 0, %s181
      %s198 = sphi 0, %s182
    $region4: #{pre_norm_feedforward.1} parent=1 // loop_header_branch
      %19 = sbr.rel (%p17) target = $region8
    $region5: #{pre_norm_feedforward.1} parent=1 // loop_body
      %s21 = ssub.s32 %s16, 1
      %s22 = ssub.s32 %s16, 2
      %s23 = sadd.s32 %s16, 1
      %s24 = ssub.s32 %s16, %s23
      %p25 = scmp.eq.s32.totalorder %s24, 0
      %s27 = sadd.s32 %s26, 1
      %s28 = scalar_select %p25, %s26, %s27
      %p31 = pneg %p25
      %p32 = scmp.eq.s32.totalorder %s16, 7
      %p33 = por %p31, %p32
      %p34 = scmp.ne.s32.totalorder %s26, %s29
      %p35 = scmp.eq.s32.totalorder %s16, 0
      %p36 = por %p34, %p35
      %p37 = scmp.ne.s32.totalorder %s26, %s29
      %p38 = scmp.eq.s32.totalorder %s21, 7
      %p39 = por %p37, %p38
      %p40 = scmp.ne.s32.totalorder %s29, %s30
      %p41 = scmp.eq.s32.totalorder %s21, 0
      %p42 = por %p40, %p41
      %p43 = scmp.ne.s32.totalorder %s29, %s30
      %p44 = scmp.eq.s32.totalorder %s22, 7
      %p45 = por %p43, %p44
      %p47 = scmp.ne.s32.totalorder %s30, %s46
      %p48 = scmp.eq.s32.totalorder %s22, 0
      %p49 = por %p47, %p48
      %s51 = sadd.s32 %s50, 1
      %p54 = scmp.eq.s32.totalorder %s16, 7
      %p55 = scmp.ne.s32.totalorder %s50, %s52
      %p56 = scmp.eq.s32.totalorder %s16, 0
      %p57 = por %p55, %p56
      %p58 = scmp.ne.s32.totalorder %s50, %s52
      %p59 = scmp.eq.s32.totalorder %s21, 7
      %p60 = por %p58, %p59
      %p61 = scmp.ne.s32.totalorder %s52, %s53
      %p62 = scmp.eq.s32.totalorder %s21, 0
      %p63 = por %p61, %p62
      %p64 = scmp.ne.s32.totalorder %s52, %s53
      %p65 = scmp.eq.s32.totalorder %s22, 7
      %p66 = por %p64, %p65
      %p68 = scmp.ne.s32.totalorder %s53, %s67
      %p69 = scmp.eq.s32.totalorder %s22, 0
      %p70 = por %p68, %p69
      %s72 = sadd.s32 %s71, 1
      %p75 = scmp.eq.s32.totalorder %s16, 7
      %p76 = scmp.ne.s32.totalorder %s71, %s73
      %p77 = scmp.eq.s32.totalorder %s16, 0
      %p78 = por %p76, %p77
      %p79 = scmp.ne.s32.totalorder %s71, %s73
      %p80 = scmp.eq.s32.totalorder %s21, 7
      %p81 = por %p79, %p80
      %p82 = scmp.ne.s32.totalorder %s73, %s74
      %p83 = scmp.eq.s32.totalorder %s21, 0
      %p84 = por %p82, %p83
      %p85 = scmp.ne.s32.totalorder %s73, %s74
      %p86 = scmp.eq.s32.totalorder %s22, 7
      %p87 = por %p85, %p86
      %p89 = scmp.ne.s32.totalorder %s74, %s88
      %p90 = scmp.eq.s32.totalorder %s22, 0
      %p91 = por %p89, %p90
      %s93 = sadd.s32 %s92, 1
      %p96 = scmp.eq.s32.totalorder %s16, 7
      %p97 = scmp.ne.s32.totalorder %s92, %s94
      %p98 = scmp.eq.s32.totalorder %s16, 0
      %p99 = por %p97, %p98
      %p100 = scmp.ne.s32.totalorder %s92, %s94
      %p101 = scmp.eq.s32.totalorder %s21, 7
      %p102 = por %p100, %p101
      %p103 = scmp.ne.s32.totalorder %s94, %s95
      %p104 = scmp.eq.s32.totalorder %s21, 0
      %p105 = por %p103, %p104
      %p106 = scmp.ne.s32.totalorder %s94, %s95
      %p107 = scmp.eq.s32.totalorder %s22, 7
      %p108 = por %p106, %p107
      %p110 = scmp.ne.s32.totalorder %s95, %s109
      %p111 = scmp.eq.s32.totalorder %s22, 0
      %p112 = por %p110, %p111
      %s114 = sadd.s32 %s113, 1
      %p117 = scmp.eq.s32.totalorder %s16, 7
      %p118 = scmp.ne.s32.totalorder %s113, %s115
      %p119 = scmp.eq.s32.totalorder %s16, 0
      %p120 = por %p118, %p119
      %p121 = scmp.ne.s32.totalorder %s113, %s115
      %p122 = scmp.eq.s32.totalorder %s21, 7
      %p123 = por %p121, %p122
      %p124 = scmp.ne.s32.totalorder %s115, %s116
      %p125 = scmp.eq.s32.totalorder %s21, 0
      %p126 = por %p124, %p125
      %p127 = scmp.ne.s32.totalorder %s115, %s116
      %p128 = scmp.eq.s32.totalorder %s22, 7
      %p129 = por %p127, %p128
      %p131 = scmp.ne.s32.totalorder %s116, %s130
      %p132 = scmp.eq.s32.totalorder %s22, 0
      %p133 = por %p131, %p132
      %s135 = sadd.s32 %s134, 1
      %p138 = scmp.eq.s32.totalorder %s16, 7
      %p139 = scmp.ne.s32.totalorder %s134, %s136
      %p140 = scmp.eq.s32.totalorder %s16, 0
      %p141 = por %p139, %p140
      %p142 = scmp.ne.s32.totalorder %s134, %s136
      %p143 = scmp.eq.s32.totalorder %s21, 7
      %p144 = por %p142, %p143
      %p145 = scmp.ne.s32.totalorder %s136, %s137
      %p146 = scmp.eq.s32.totalorder %s21, 0
      %p147 = por %p145, %p146
      %p148 = scmp.ne.s32.totalorder %s136, %s137
      %p149 = scmp.eq.s32.totalorder %s22, 7
      %p150 = por %p148, %p149
      %p152 = scmp.ne.s32.totalorder %s137, %s151
      %p153 = scmp.eq.s32.totalorder %s22, 0
      %p154 = por %p152, %p153
      %s156 = sadd.s32 %s155, 1
      %p159 = scmp.eq.s32.totalorder %s16, 7
      %p160 = scmp.ne.s32.totalorder %s155, %s157
      %p161 = scmp.eq.s32.totalorder %s16, 0
      %p162 = por %p160, %p161
      %p163 = scmp.ne.s32.totalorder %s155, %s157
      %p164 = scmp.eq.s32.totalorder %s21, 7
      %p165 = por %p163, %p164
      %p166 = scmp.ne.s32.totalorder %s157, %s158
      %p167 = scmp.eq.s32.totalorder %s21, 0
      %p168 = por %p166, %p167
      %p169 = scmp.ne.s32.totalorder %s157, %s158
      %p170 = scmp.eq.s32.totalorder %s22, 7
      %p171 = por %p169, %p170
      %p173 = scmp.ne.s32.totalorder %s158, %s172
      %p174 = scmp.eq.s32.totalorder %s22, 0
      %p175 = por %p173, %p174
      %s176 = ssub.s32 %s16, %s23
      %p177 = scmp.eq.s32.totalorder %s176, 0
      %s179 = sadd.s32 %s178, 1
      %s180 = scalar_select %p177, %s178, %s179
      %p183 = pneg %p177
      %p184 = scmp.eq.s32.totalorder %s16, 7
      %p185 = por %p183, %p184
      %p186 = scmp.ne.s32.totalorder %s178, %s181
      %p187 = scmp.eq.s32.totalorder %s16, 0
      %p188 = por %p186, %p187
      %p189 = scmp.ne.s32.totalorder %s178, %s181
      %p190 = scmp.eq.s32.totalorder %s21, 7
      %p191 = por %p189, %p190
      %p192 = scmp.ne.s32.totalorder %s181, %s182
      %p193 = scmp.eq.s32.totalorder %s21, 0
      %p194 = por %p192, %p193
      %p195 = scmp.ne.s32.totalorder %s181, %s182
      %p196 = scmp.eq.s32.totalorder %s22, 7
      %p197 = por %p195, %p196
      %p199 = scmp.ne.s32.totalorder %s182, %s198
      %p200 = scmp.eq.s32.totalorder %s22, 0
      %p201 = por %p199, %p200
      %p202 = scmp.le.s32.totalorder 1, %s16
      %p203 = scmp.lt.s32.totalorder %s16, 9
      %p204 = pnand %p202, %p203
      %p205 = pneg %p204
      // Predicated region
      $region9: #{pre_norm_feedforward.1} parent=5 // pred_check
        _
      $region10: #{pre_norm_feedforward.1} parent=5 // pred_check_branch
        %207 = sbr.rel (%p204) target = $region12
      $region11: #{pre_norm_feedforward.1} parent=5 // pred_region
        %s208 = ssub.s32 %s16, 1
        // Predicated region
        $region13: #{pre_norm_feedforward.1} parent=11 // pred_check
          %p209 = pneg %p63
        $region14: #{pre_norm_feedforward.1} parent=11 // pred_check_branch
          %211 = sbr.rel (%p209) target = $region16
        $region15: #{pre_norm_feedforward.1} parent=11 // pred_region
          _
        $region16: #{pre_norm_feedforward.1} parent=11 // pred_fallthru
          _
        // Predicated region
        $region17: #{pre_norm_feedforward.1} parent=11 // pred_check
          %p212 = pneg %p84
        $region18: #{pre_norm_feedforward.1} parent=11 // pred_check_branch
          %214 = sbr.rel (%p212) target = $region20
        $region19: #{pre_norm_feedforward.1} parent=11 // pred_region
          _
        $region20: #{pre_norm_feedforward.1} parent=11 // pred_fallthru
          _
        // Predicated region
        $region21: #{pre_norm_feedforward.1} parent=11 // pred_check
          %p215 = pneg %p105
        $region22: #{pre_norm_feedforward.1} parent=11 // pred_check_branch
          %217 = sbr.rel (%p215) target = $region24
        $region23: #{pre_norm_feedforward.1} parent=11 // pred_region
          _
        $region24: #{pre_norm_feedforward.1} parent=11 // pred_fallthru
          _
        // Predicated region
        $region25: #{pre_norm_feedforward.1} parent=11 // pred_check
          %p218 = pneg %p126
        $region26: #{pre_norm_feedforward.1} parent=11 // pred_check_branch
          %220 = sbr.rel (%p218) target = $region28
        $region27: #{pre_norm_feedforward.1} parent=11 // pred_region
          _
        $region28: #{pre_norm_feedforward.1} parent=11 // pred_fallthru
          _
        // Predicated region
        $region29: #{pre_norm_feedforward.1} parent=11 // pred_check
          %p221 = pneg %p147
        $region30: #{pre_norm_feedforward.1} parent=11 // pred_check_branch
          %223 = sbr.rel (%p221) target = $region32
        $region31: #{pre_norm_feedforward.1} parent=11 // pred_region
          _
        $region32: #{pre_norm_feedforward.1} parent=11 // pred_fallthru
          _
        // Predicated region
        $region33: #{pre_norm_feedforward.1} parent=11 // pred_check
          %p224 = pneg %p168
        $region34: #{pre_norm_feedforward.1} parent=11 // pred_check_branch
          %226 = sbr.rel (%p224) target = $region36
        $region35: #{pre_norm_feedforward.1} parent=11 // pred_region
          _
        $region36: #{pre_norm_feedforward.1} parent=11 // pred_fallthru
          _
      $region12: #{pre_norm_feedforward.1} parent=5 // pred_fallthru
        _
      %p227 = scmp.lt.s32.totalorder %s16, 8
      // Predicated region
      $region37: #{pre_norm_feedforward.1} parent=5 // pred_check
        %p228 = pneg %p227
      $region38: #{pre_norm_feedforward.1} parent=5 // pred_check_branch
        %230 = sbr.rel (%p228) target = $region40
      $region39: #{pre_norm_feedforward.1} parent=5 // pred_region
        // Predicated region
        $region41: #{pre_norm_feedforward.1} parent=39 // pred_check
          %p231 = pneg %p36
        $region42: #{pre_norm_feedforward.1} parent=39 // pred_check_branch
          %233 = sbr.rel (%p231) target = $region44
        $region43: #{pre_norm_feedforward.1} parent=39 // pred_region
          %s234 = smul.u32 2, %s16
          %p235 = scmp.lt.s32.totalorder %s234, 15
          %s236 = scalar_select %p235, %s234, 15
          %s237 = smul.addr %s236, 8
          %s238 = scalar_lea.vmem %s0, %s237
          %s239 = smul.u32 2, %s16
        $region44: #{pre_norm_feedforward.1} parent=39 // pred_fallthru
          _
      $region40: #{pre_norm_feedforward.1} parent=5 // pred_fallthru
        _
      %p240 = scmp.le.s32.totalorder 1, %s16
      %p241 = scmp.lt.s32.totalorder %s16, 9
      %p242 = pnand %p240, %p241
      %p243 = pneg %p242
      // Predicated region
      $region45: #{pre_norm_feedforward.1} parent=5 // pred_check
        _
      $region46: #{pre_norm_feedforward.1} parent=5 // pred_check_branch
        %245 = sbr.rel (%p242) target = $region48
      $region47: #{pre_norm_feedforward.1} parent=5 // pred_region
        %s246 = ssub.s32 %s16, 1
        %s247 = smul.u32 2, %s21
        %p248 = scmp.lt.s32.totalorder %s247, 15
        %s249 = scalar_select %p248, %s247, 15
        %s250 = smul.addr %s249, 8
        %s251 = scalar_lea.vmem %s0, %s250
        %p252 = pneg %p42
        %p253 = pneg %p39
        %p254 = pneg %p63
        %p255 = pneg %p60
        %p256 = pneg %p84
        %p257 = pneg %p81
        %p258 = pneg %p105
        %p259 = pneg %p102
        %p260 = pneg %p126
        %p261 = pneg %p123
        %p262 = pneg %p147
        %p263 = pneg %p144
        %p264 = pneg %p168
        %p265 = pneg %p165
        %p266 = pneg %p194
        %p267 = pneg %p191
        %s268 = sand.u32 %s181, 1
        %s269 = scalar_lea.sflag [#allocation3], %s268
        %s270 = sand.u32 %s181, 1
        %s271 = smul.addr %s270, 16
        %s272 = scalar_lea.vmem [#allocation2], %s271
        %s273 = smul.u32 2, %s21
        %p274 = scmp.lt.s32.totalorder %s273, 15
        %s275 = scalar_select %p274, %s273, 15
        %s276 = smul.addr %s275, 8
        %s277 = scalar_lea.vmem %s0, %s276
        %s278 = smul.u32 2, %s21
        %s279 = smul.u32 2, %s21
        %v281 = vld [vmem:[%s277] sm:$0xff]
        %v282 = vld [vmem:[%s277 + $0x8] sm:$0xff]
        %v283 = vld [vmem:[%s1] sm:$0x1]
        %v284 = vld [vmem:[%s2] sm:$0x1]
        %285 = vadd.xlane.f32.xlu0 %v281
        %v286 = vpop.xlane.xlu0 %285
        %287 = vadd.xlane.f32.xlu0 %v282
        %v288 = vpop.xlane.xlu0 %287
        %v289 = vrcp.pop 128.0
        %v290 = vmul.f32 %v286, %v289
        %v291 = vmul.f32 %v288, %v289
        %v292 = vmul.f32 %v281, %v281
        %v293 = vmul.f32 %v282, %v282
        %294 = vadd.xlane.f32.xlu0 %v292
        %v295 = vpop.xlane.xlu0 %294
        %296 = vadd.xlane.f32.xlu0 %v293
        %v297 = vpop.xlane.xlu0 %296
        %v298 = vmul.f32 %v295, %v289
        %v299 = vmul.f32 %v297, %v289
        %v300 = vmul.f32 %v290, %v290
        %v301 = vmul.f32 %v291, %v291
        %v302 = vsub.f32 %v298, %v300
        %v303 = vsub.f32 %v299, %v301
        %v304 = vmax.f32 %v302, 0.0
        %v305 = vmax.f32 %v303, 0.0
        %v306 = vsub.f32 %v281, %v290
        %v307 = vsub.f32 %v282, %v291
        %v308 = vadd.f32 %v304, 1e-05
        %v309 = vadd.f32 %v305, 1e-05
        %v310 = vrsqrt.pop %v308
        %v311 = vrsqrt.pop %v309
        %v312 = vmul.f32 %v306, %v310
        %v313 = vmul.f32 %v307, %v311
        %v315 = vlaneseq
        %v316 = vshrl.u32 %v315, 7
        %v317 = vsub.s32 0, %v316
        %v318 = vrot.slane %v283, %v317
        %v320 = vmul.f32 %v312, %v318
        %v321 = vmul.f32 %v313, %v318
        %v323 = vlaneseq
        %v324 = vshrl.u32 %v323, 7
        %v325 = vsub.s32 0, %v324
        %v326 = vrot.slane %v284, %v325
        %v328 = vadd.f32 %v320, %v326
        %v329 = vadd.f32 %v321, %v326
        %v330 = vpack.c.bf16 %v329, %v328
        %v331 = vld [vmem:[%s3] sm:$0xff]
        %v332 = vld [vmem:[%s3 + $0x8] sm:$0xff]
        %v333 = vld [vmem:[%s3 + $0x10] sm:$0xff]
        %v334 = vld [vmem:[%s3 + $0x18] sm:$0xff]
        %v335 = vld [vmem:[%s3 + $0x20] sm:$0xff]
        %v336 = vld [vmem:[%s3 + $0x28] sm:$0xff]
        %v337 = vld [vmem:[%s3 + $0x30] sm:$0xff]
        %v338 = vld [vmem:[%s3 + $0x38] sm:$0xff]
        %v339 = vld [vmem:[%s3 + $0x40] sm:$0xff]
        %v340 = vld [vmem:[%s3 + $0x48] sm:$0xff]
        %v341 = vld [vmem:[%s3 + $0x50] sm:$0xff]
        %v342 = vld [vmem:[%s3 + $0x58] sm:$0xff]
        %v343 = vld [vmem:[%s3 + $0x60] sm:$0xff]
        %v344 = vld [vmem:[%s3 + $0x68] sm:$0xff]
        %v345 = vld [vmem:[%s3 + $0x70] sm:$0xff]
        %v346 = vld [vmem:[%s3 + $0x78] sm:$0xff]
        %v347 = vld [vmem:[%s4] sm:$0x3]
        %v349 = vlaneseq
        %v350 = vshrl.u32 %v349, 7
        %v351 = vsub.s32 0, %v350
        %v352 = vrot.slane %v347, %v351
        %v353 = vlaneseq
        %v354 = vshrl.u32 %v353, 7
        %v355 = vsub.s32 1, %v354
        %v356 = vrot.slane %v347, %v355
        %v375 = vunpack.c.l.b16 %v331
        %v376 = vunpack.c.h.b16 %v331
        %v377 = vunpack.c.l.b16 %v332
        %v378 = vunpack.c.h.b16 %v332
        %v379 = vunpack.c.l.b16 %v333
        %v380 = vunpack.c.h.b16 %v333
        %v381 = vunpack.c.l.b16 %v334
        %v382 = vunpack.c.h.b16 %v334
        %v383 = vunpack.c.l.b16 %v335
        %v384 = vunpack.c.h.b16 %v335
        %v385 = vunpack.c.l.b16 %v336
        %v386 = vunpack.c.h.b16 %v336
        %v387 = vunpack.c.l.b16 %v337
        %v388 = vunpack.c.h.b16 %v337
        %v389 = vunpack.c.l.b16 %v338
        %v390 = vunpack.c.h.b16 %v338
        %v391 = vunpack.c.l.b16 %v339
        %v392 = vunpack.c.h.b16 %v339
        %v393 = vunpack.c.l.b16 %v340
        %v394 = vunpack.c.h.b16 %v340
        %v395 = vunpack.c.l.b16 %v341
        %v396 = vunpack.c.h.b16 %v341
        %v397 = vunpack.c.l.b16 %v342
        %v398 = vunpack.c.h.b16 %v342
        %v399 = vunpack.c.l.b16 %v343
        %v400 = vunpack.c.h.b16 %v343
        %v401 = vunpack.c.l.b16 %v344
        %v402 = vunpack.c.h.b16 %v344
        %v403 = vunpack.c.l.b16 %v345
        %v404 = vunpack.c.h.b16 %v345
        %v405 = vunpack.c.l.b16 %v346
        %v406 = vunpack.c.h.b16 %v346
        %v407 = vpack.c.b16 %v377, %v375
        %v408 = vpack.c.b16 %v378, %v376
        %v409 = vpack.c.b16 %v381, %v379
        %v410 = vpack.c.b16 %v382, %v380
        %v411 = vpack.c.b16 %v385, %v383
        %v412 = vpack.c.b16 %v386, %v384
        %v413 = vpack.c.b16 %v389, %v387
        %v414 = vpack.c.b16 %v390, %v388
        %v415 = vpack.c.b16 %v393, %v391
        %v416 = vpack.c.b16 %v394, %v392
        %v417 = vpack.c.b16 %v397, %v395
        %v418 = vpack.c.b16 %v398, %v396
        %v419 = vpack.c.b16 %v401, %v399
        %v420 = vpack.c.b16 %v402, %v400
        %v421 = vpack.c.b16 %v405, %v403
        %v422 = vpack.c.b16 %v406, %v404
        %439 = vmatprep.subr.bf16.mxu0 %v422
        %440 = vmatpush1.bf16.msra.mxu0 %v421
        %441 = vmatprep.subr.bf16.mxu0 %v420
        %442 = vmatpush1.bf16.msra.mxu0 %v419
        %443 = vmatprep.subr.bf16.mxu0 %v418
        %444 = vmatpush1.bf16.msra.mxu0 %v417
        %445 = vmatprep.subr.bf16.mxu0 %v416
        %446 = vmatpush1.bf16.msra.mxu0 %v415
        %447 = vmatprep.subr.bf16.mxu0 %v414
        %448 = vmatpush1.bf16.msra.mxu0 %v413
        %449 = vmatprep.subr.bf16.mxu0 %v412
        %450 = vmatpush1.bf16.msra.mxu0 %v411
        %451 = vmatprep.subr.bf16.mxu0 %v410
        %452 = vmatpush1.bf16.msra.mxu0 %v409
        %453 = vmatprep.subr.bf16.mxu0 %v408
        %454 = vmatpush1.bf16.msra.mxu0 %v407
        %455 = vmatprep.subr.bf16.mxu0 0
        %456 = vmatpush2.bf16.msra.mxu0 0
        %457 = vmatprep.subr.bf16.mxu0 0
        %458 = vmatpush2.bf16.msra.mxu0 0
        %459 = vmatprep.subr.bf16.mxu0 0
        %460 = vmatpush2.bf16.msra.mxu0 0
        %461 = vmatprep.subr.bf16.mxu0 0
        %462 = vmatpush2.bf16.msra.mxu0 0
        %463 = vmatprep.subr.bf16.mxu0 0
        %464 = vmatpush2.bf16.msra.mxu0 0
        %465 = vmatprep.subr.bf16.mxu0 0
        %466 = vmatpush2.bf16.msra.mxu0 0
        %467 = vmatprep.subr.bf16.mxu0 0
        %468 = vmatpush2.bf16.msra.mxu0 0
        %469 = vmatprep.subr.bf16.mxu0 0
        %470 = vmatpush2.bf16.msra.mxu0 0
        %471 = vmatprep.mubr.bf16.mxu0 0
        %472 = vmatmul.mubr.bf16.gmra.mxu0 %v330
        %v473 = vpop.f32.mrf.mxu0
        %v474 = vadd.f32 %v352, %v473
        %v475 = vpop.f32.mrf.mxu0
        %v476 = vadd.f32 %v356, %v475
        %v477 = vpop.f32.mrf.mxu0
        %v478 = vadd.f32 %v352, %v477
        %v479 = vpop.f32.mrf.mxu0
        %v480 = vadd.f32 %v356, %v479
        %481 = vdwg.mxu0
        %v482 = vmul.f32 %v474, 0.5
        %v483 = vmul.f32 %v476, 0.5
        %v484 = vmul.f32 %v478, 0.5
        %v485 = vmul.f32 %v480, 0.5
        %v486 = vmul.f32 %v474, 0.044715
        %v487 = vmul.f32 %v476, 0.044715
        %v488 = vmul.f32 %v478, 0.044715
        %v489 = vmul.f32 %v480, 0.044715
        %v490 = vmul.f32 %v486, %v474
        %v491 = vmul.f32 %v487, %v476
        %v492 = vmul.f32 %v488, %v478
        %v493 = vmul.f32 %v489, %v480
        %v494 = vmul.f32 %v490, %v474
        %v495 = vmul.f32 %v491, %v476
        %v496 = vmul.f32 %v492, %v478
        %v497 = vmul.f32 %v493, %v480
        %v498 = vadd.f32 %v474, %v494
        %v499 = vadd.f32 %v476, %v495
        %v500 = vadd.f32 %v478, %v496
        %v501 = vadd.f32 %v480, %v497
        %v502 = vmul.f32 %v498, 0.7978846
        %v503 = vmul.f32 %v499, 0.7978846
        %v504 = vmul.f32 %v500, 0.7978846
        %v505 = vmul.f32 %v501, 0.7978846
        %v506 = vtanh.pop %v502
        %v507 = vtanh.pop %v503
        %v508 = vtanh.pop %v504
        %v509 = vtanh.pop %v505
        %v510 = vadd.f32 %v506, 1.0
        %v511 = vadd.f32 %v507, 1.0
        %v512 = vadd.f32 %v508, 1.0
        %v513 = vadd.f32 %v509, 1.0
        %v514 = vmul.f32 %v482, %v510
        %v515 = vmul.f32 %v483, %v511
        %v516 = vmul.f32 %v484, %v512
        %v517 = vmul.f32 %v485, %v513
        %v518 = vpack.c.bf16 %v516, %v514
        %v519 = vpack.c.bf16 %v517, %v515
        %v520 = vld [vmem:[%s5] sm:$0xf]
        %v521 = vld [vmem:[%s5 + $0x4] sm:$0xf]
        %v522 = vld [vmem:[%s5 + $0x8] sm:$0xf]
        %v523 = vld [vmem:[%s5 + $0xc] sm:$0xf]
        %v524 = vld [vmem:[%s5 + $0x10] sm:$0xf]
        %v525 = vld [vmem:[%s5 + $0x14] sm:$0xf]
        %v526 = vld [vmem:[%s5 + $0x18] sm:$0xf]
        %v527 = vld [vmem:[%s5 + $0x1c] sm:$0xf]
        %v528 = vld [vmem:[%s5 + $0x20] sm:$0xf]
        %v529 = vld [vmem:[%s5 + $0x24] sm:$0xf]
        %v530 = vld [vmem:[%s5 + $0x28] sm:$0xf]
        %v531 = vld [vmem:[%s5 + $0x2c] sm:$0xf]
        %v532 = vld [vmem:[%s5 + $0x30] sm:$0xf]
        %v533 = vld [vmem:[%s5 + $0x34] sm:$0xf]
        %v534 = vld [vmem:[%s5 + $0x38] sm:$0xf]
        %v535 = vld [vmem:[%s5 + $0x3c] sm:$0xf]
        %v536 = vld [vmem:[%s5 + $0x40] sm:$0xf]
        %v537 = vld [vmem:[%s5 + $0x44] sm:$0xf]
        %v538 = vld [vmem:[%s5 + $0x48] sm:$0xf]
        %v539 = vld [vmem:[%s5 + $0x4c] sm:$0xf]
        %v540 = vld [vmem:[%s5 + $0x50] sm:$0xf]
        %v541 = vld [vmem:[%s5 + $0x54] sm:$0xf]
        %v542 = vld [vmem:[%s5 + $0x58] sm:$0xf]
        %v543 = vld [vmem:[%s5 + $0x5c] sm:$0xf]
        %v544 = vld [vmem:[%s5 + $0x60] sm:$0xf]
        %v545 = vld [vmem:[%s5 + $0x64] sm:$0xf]
        %v546 = vld [vmem:[%s5 + $0x68] sm:$0xf]
        %v547 = vld [vmem:[%s5 + $0x6c] sm:$0xf]
        %v548 = vld [vmem:[%s5 + $0x70] sm:$0xf]
        %v549 = vld [vmem:[%s5 + $0x74] sm:$0xf]
        %v550 = vld [vmem:[%s5 + $0x78] sm:$0xf]
        %v551 = vld [vmem:[%s5 + $0x7c] sm:$0xf]
        %v552 = vld [vmem:[%s6] sm:$0x1]
        %v554 = vlaneseq
        %v555 = vshrl.u32 %v554, 7
        %v556 = vsub.s32 0, %v555
        %v557 = vrot.slane %v552, %v556
        %v591 = vunpack.c.l.b16 %v520
        %v592 = vunpack.c.l.b16 %v521
        %v593 = vunpack.c.l.b16 %v522
        %v594 = vunpack.c.l.b16 %v523
        %v595 = vunpack.c.l.b16 %v524
        %v596 = vunpack.c.l.b16 %v525
        %v597 = vunpack.c.l.b16 %v526
        %v598 = vunpack.c.l.b16 %v527
        %v599 = vunpack.c.l.b16 %v528
        %v600 = vunpack.c.l.b16 %v529
        %v601 = vunpack.c.l.b16 %v530
        %v602 = vunpack.c.l.b16 %v531
        %v603 = vunpack.c.l.b16 %v532
        %v604 = vunpack.c.l.b16 %v533
        %v605 = vunpack.c.l.b16 %v534
        %v606 = vunpack.c.l.b16 %v535
        %v607 = vunpack.c.l.b16 %v536
        %v608 = vunpack.c.l.b16 %v537
        %v609 = vunpack.c.l.b16 %v538
        %v610 = vunpack.c.l.b16 %v539
        %v611 = vunpack.c.l.b16 %v540
        %v612 = vunpack.c.l.b16 %v541
        %v613 = vunpack.c.l.b16 %v542
        %v614 = vunpack.c.l.b16 %v543
        %v615 = vunpack.c.l.b16 %v544
        %v616 = vunpack.c.l.b16 %v545
        %v617 = vunpack.c.l.b16 %v546
        %v618 = vunpack.c.l.b16 %v547
        %v619 = vunpack.c.l.b16 %v548
        %v620 = vunpack.c.l.b16 %v549
        %v621 = vunpack.c.l.b16 %v550
        %v622 = vunpack.c.l.b16 %v551
        %v623 = vpack.c.b16 %v592, %v591
        %v624 = vpack.c.b16 %v594, %v593
        %v625 = vpack.c.b16 %v596, %v595
        %v626 = vpack.c.b16 %v598, %v597
        %v627 = vpack.c.b16 %v600, %v599
        %v628 = vpack.c.b16 %v602, %v601
        %v629 = vpack.c.b16 %v604, %v603
        %v630 = vpack.c.b16 %v606, %v605
        %v631 = vpack.c.b16 %v608, %v607
        %v632 = vpack.c.b16 %v610, %v609
        %v633 = vpack.c.b16 %v612, %v611
        %v634 = vpack.c.b16 %v614, %v613
        %v635 = vpack.c.b16 %v616, %v615
        %v636 = vpack.c.b16 %v618, %v617
        %v637 = vpack.c.b16 %v620, %v619
        %v638 = vpack.c.b16 %v622, %v621
        %655 = vmatprep.subr.bf16.mxu0 0
        %656 = vmatpush1.bf16.msra.mxu0 %v630
        %657 = vmatprep.subr.bf16.mxu0 0
        %658 = vmatpush1.bf16.msra.mxu0 %v629
        %659 = vmatprep.subr.bf16.mxu0 0
        %660 = vmatpush1.bf16.msra.mxu0 %v628
        %661 = vmatprep.subr.bf16.mxu0 0
        %662 = vmatpush1.bf16.msra.mxu0 %v627
        %663 = vmatprep.subr.bf16.mxu0 0
        %664 = vmatpush1.bf16.msra.mxu0 %v626
        %665 = vmatprep.subr.bf16.mxu0 0
        %666 = vmatpush1.bf16.msra.mxu0 %v625
        %667 = vmatprep.subr.bf16.mxu0 0
        %668 = vmatpush1.bf16.msra.mxu0 %v624
        %669 = vmatprep.subr.bf16.mxu0 0
        %670 = vmatpush1.bf16.msra.mxu0 %v623
        %671 = vmatprep.subr.bf16.mxu0 0
        %672 = vmatpush2.bf16.msra.mxu0 %v638
        %673 = vmatprep.subr.bf16.mxu0 0
        %674 = vmatpush2.bf16.msra.mxu0 %v637
        %675 = vmatprep.subr.bf16.mxu0 0
        %676 = vmatpush2.bf16.msra.mxu0 %v636
        %677 = vmatprep.subr.bf16.mxu0 0
        %678 = vmatpush2.bf16.msra.mxu0 %v635
        %679 = vmatprep.subr.bf16.mxu0 0
        %680 = vmatpush2.bf16.msra.mxu0 %v634
        %681 = vmatprep.subr.bf16.mxu0 0
        %682 = vmatpush2.bf16.msra.mxu0 %v633
        %683 = vmatprep.subr.bf16.mxu0 0
        %684 = vmatpush2.bf16.msra.mxu0 %v632
        %685 = vmatprep.subr.bf16.mxu0 0
        %686 = vmatpush2.bf16.msra.mxu0 %v631
        %687 = vmatprep.mubr.bf16.mxu0 %v519
        %688 = vmatmul.mubr.bf16.gmra.mxu0 %v518
        %v689 = vpop.f32.mrf.mxu0
        %v690 = vadd.f32 %v557, %v689
        %v691 = vpop.f32.mrf.mxu0
        %v692 = vpop.f32.mrf.mxu0
        %v693 = vadd.f32 %v557, %v692
        %v694 = vpop.f32.mrf.mxu0
        %695 = vdwg.mxu0
        %696 = vst [vmem:[%s272] sm:$0xff] %v690
        %697 = vst [vmem:[%s272 + $0x8] sm:$0xff] %v693
        %s698 = sand.u32 %s181, 1
        %s699 = scalar_lea.sflag [#allocation3], %s698
        %s700 = sand.u32 %s181, 1
        %s701 = smul.addr %s700, 16
        %s702 = scalar_lea.vmem [#allocation2], %s701
        // Predicated region
        $region49: #{pre_norm_feedforward.1} parent=47 // pred_check
          %p703 = pneg %p191
        $region50: #{pre_norm_feedforward.1} parent=47 // pred_check_branch
          %705 = sbr.rel (%p703) target = $region52
        $region51: #{pre_norm_feedforward.1} parent=47 // pred_region
          %s706 = smul.u32 2, %s21
          %s708 = ssub.s32 256, 256
          %709 = vsyncadd %s699, %s708
          %s710 = smul.addr %s706, 128
          %s711 = scalar_lea.hbm %s7, %s710
          %s712 = sshll.u32 %s702, 4
          %s713 = int_to_ptr.vmem [resolvable:$true] %s712
          %718 = dma.vmem_to_hbm [thread:$0]  %s713, 256, %s711, %s699, 128, 128, 8
        $region52: #{pre_norm_feedforward.1} parent=47 // pred_fallthru
          _
      $region48: #{pre_norm_feedforward.1} parent=5 // pred_fallthru
        _
      %p719 = scmp.le.s32.totalorder 2, %s16
      // Predicated region
      $region53: #{pre_norm_feedforward.1} parent=5 // pred_check
        %p720 = pneg %p719
      $region54: #{pre_norm_feedforward.1} parent=5 // pred_check_branch
        %722 = sbr.rel (%p720) target = $region56
      $region55: #{pre_norm_feedforward.1} parent=5 // pred_region
        %s723 = ssub.s32 %s16, 2
        // Predicated region
        $region57: #{pre_norm_feedforward.1} parent=55 // pred_check
          %p724 = pneg %p197
        $region58: #{pre_norm_feedforward.1} parent=55 // pred_check_branch
          %726 = sbr.rel (%p724) target = $region60
        $region59: #{pre_norm_feedforward.1} parent=55 // pred_region
          %s727 = sand.u32 %s182, 1
          %s728 = scalar_lea.sflag [#allocation3], %s727
          %s729 = sand.u32 %s182, 1
          %s730 = smul.addr %s729, 16
          %s731 = scalar_lea.vmem [#allocation2], %s730
          %732 = dma.done %s728, 256
        $region60: #{pre_norm_feedforward.1} parent=55 // pred_fallthru
          _
      $region56: #{pre_norm_feedforward.1} parent=5 // pred_fallthru
        _
    $region6: #{pre_norm_feedforward.1} parent=1 // loop_footer
      %s20 = sadd.s32 1, %s16
    $region7: #{pre_norm_feedforward.1} parent=1 // loop_footer_branch
      %15 = sbr.rel target = $region3
    $region8: #{pre_norm_feedforward.1} parent=1 // loop_exit
      _
    %733 = vsyncpa [#allocation3], 1
    %s734 = scalar_lea.sflag [#allocation3], 1
    %735 = vsyncpa %s734, 1

// kernel: pre_norm_feedforward.1
$region0: #{pre_norm_feedforward.1}
  #allocation0 [shape = 'u32[]', space=smem, size = 0x4, offset = 0x4, fixed_abs, tag = 'smem constant byte address 0x4 - core index']
  #allocation1 [shape = 'u32[144,128]{1,0:T(1,128)}', space=vmem, size = 0x12000, scoped, tag = 'internal scratch']
  %s0 = inlined_call_operand.vmem [shape: f32[128,128], index: 0, kind: input, shape index: {}]
  %s1 = inlined_call_operand.vmem [shape: f32[1,128], index: 1, kind: input, shape index: {}]
  %s2 = inlined_call_operand.vmem [shape: f32[1,128], index: 2, kind: input, shape index: {}]
  %s3 = inlined_call_operand.vmem [shape: bf16[128,256], index: 3, kind: input, shape index: {}]
  %s4 = inlined_call_operand.vmem [shape: f32[1,256], index: 4, kind: input, shape index: {}]
  %s5 = inlined_call_operand.vmem [shape: bf16[256,128], index: 5, kind: input, shape index: {}]
  %s6 = inlined_call_operand.vmem [shape: f32[1,128], index: 6, kind: input, shape index: {}]
  %s7 = inlined_call_operand.hbm [shape: f32[128,128], index: 7, kind: output, shape index: {}]
  %s8 = sld [smem:[#allocation0]]
  $region61: #{pre_norm_feedforward.1} parent=0
    _
  %s10 = ssub.s32 1, %s8
  %s11 = scalar_select 0, %s10, %s8
  $region1: #{pre_norm_feedforward.1} parent=0
    #allocation2 [shape = 'u8[16384]{0}', space=vmem, size = 0x4000, scoped, tag = 'output window, operand 0']
    #allocation3 [shape = 's32[2]{0}', space=sflag, size = 0x8, scoped, tag = 'scoped memory for pre_norm_feedforward.1']
    %12 = vsyncpa [#allocation3], 0
    %s13 = scalar_lea.sflag [#allocation3], 1
    %14 = vsyncpa %s13, 0
    loop: start=0, step=1, limit=10
    $region2: #{pre_norm_feedforward.1} parent=1 // loop_pre_header
      _
    $region3: #{pre_norm_feedforward.1} parent=1 // loop_header
      %s16 = sphi 0, %s20
      %p17 = scmp.ge.s32.totalorder %s16, 10
      %s26 = sphi 0, %s28
      %s29 = sphi 0, %s26
      %s30 = sphi 0, %s29
      %s46 = sphi 0, %s30
      %s50 = sphi 0, %s50
      %s52 = sphi 0, %s50
      %s53 = sphi 0, %s52
      %s67 = sphi 0, %s53
      %s71 = sphi 0, %s71
      %s73 = sphi 0, %s71
      %s74 = sphi 0, %s73
      %s88 = sphi 0, %s74
      %s92 = sphi 0, %s92
      %s94 = sphi 0, %s92
      %s95 = sphi 0, %s94
      %s109 = sphi 0, %s95
      %s113 = sphi 0, %s113
      %s115 = sphi 0, %s113
      %s116 = sphi 0, %s115
      %s130 = sphi 0, %s116
      %s134 = sphi 0, %s134
      %s136 = sphi 0, %s134
      %s137 = sphi 0, %s136
      %s151 = sphi 0, %s137
      %s155 = sphi 0, %s155
      %s157 = sphi 0, %s155
      %s158 = sphi 0, %s157
      %s172 = sphi 0, %s158
      %s178 = sphi 0, %s180
      %s181 = sphi 0, %s178
      %s182 = sphi 0, %s181
      %s198 = sphi 0, %s182
    $region4: #{pre_norm_feedforward.1} parent=1 // loop_header_branch
      %19 = sbr.rel (%p17) target = $region8
    $region5: #{pre_norm_feedforward.1} parent=1 // loop_body
      %s21 = ssub.s32 %s16, 1
      %s22 = ssub.s32 %s16, 2
      %s23 = sadd.s32 %s16, 1
      %s24 = ssub.s32 %s16, %s23
      %p25 = scmp.eq.s32.totalorder %s24, 0
      %s27 = sadd.s32 %s26, 1
      %s28 = scalar_select %p25, %s26, %s27
      %p31 = pneg %p25
      %p32 = scmp.eq.s32.totalorder %s16, 7
      %p33 = por %p31, %p32
      %p34 = scmp.ne.s32.totalorder %s26, %s29
      %p35 = scmp.eq.s32.totalorder %s16, 0
      %p36 = por %p34, %p35
      %p37 = scmp.ne.s32.totalorder %s26, %s29
      %p38 = scmp.eq.s32.totalorder %s21, 7
      %p39 = por %p37, %p38
      %p40 = scmp.ne.s32.totalorder %s29, %s30
      %p41 = scmp.eq.s32.totalorder %s21, 0
      %p42 = por %p40, %p41
      %p43 = scmp.ne.s32.totalorder %s29, %s30
      %p44 = scmp.eq.s32.totalorder %s22, 7
      %p45 = por %p43, %p44
      %p47 = scmp.ne.s32.totalorder %s30, %s46
      %p48 = scmp.eq.s32.totalorder %s22, 0
      %p49 = por %p47, %p48
      %s51 = sadd.s32 %s50, 1
      %p54 = scmp.eq.s32.totalorder %s16, 7
      %p55 = scmp.ne.s32.totalorder %s50, %s52
      %p56 = scmp.eq.s32.totalorder %s16, 0
      %p57 = por %p55, %p56
      %p58 = scmp.ne.s32.totalorder %s50, %s52
      %p59 = scmp.eq.s32.totalorder %s21, 7
      %p60 = por %p58, %p59
      %p61 = scmp.ne.s32.totalorder %s52, %s53
      %p62 = scmp.eq.s32.totalorder %s21, 0
      %p63 = por %p61, %p62
      %p64 = scmp.ne.s32.totalorder %s52, %s53
      %p65 = scmp.eq.s32.totalorder %s22, 7
      %p66 = por %p64, %p65
      %p68 = scmp.ne.s32.totalorder %s53, %s67
      %p69 = scmp.eq.s32.totalorder %s22, 0
      %p70 = por %p68, %p69
      %s72 = sadd.s32 %s71, 1
      %p75 = scmp.eq.s32.totalorder %s16, 7
      %p76 = scmp.ne.s32.totalorder %s71, %s73
      %p77 = scmp.eq.s32.totalorder %s16, 0
      %p78 = por %p76, %p77
      %p79 = scmp.ne.s32.totalorder %s71, %s73
      %p80 = scmp.eq.s32.totalorder %s21, 7
      %p81 = por %p79, %p80
      %p82 = scmp.ne.s32.totalorder %s73, %s74
      %p83 = scmp.eq.s32.totalorder %s21, 0
      %p84 = por %p82, %p83
      %p85 = scmp.ne.s32.totalorder %s73, %s74
      %p86 = scmp.eq.s32.totalorder %s22, 7
      %p87 = por %p85, %p86
      %p89 = scmp.ne.s32.totalorder %s74, %s88
      %p90 = scmp.eq.s32.totalorder %s22, 0
      %p91 = por %p89, %p90
      %s93 = sadd.s32 %s92, 1
      %p96 = scmp.eq.s32.totalorder %s16, 7
      %p97 = scmp.ne.s32.totalorder %s92, %s94
      %p98 = scmp.eq.s32.totalorder %s16, 0
      %p99 = por %p97, %p98
      %p100 = scmp.ne.s32.totalorder %s92, %s94
      %p101 = scmp.eq.s32.totalorder %s21, 7
      %p102 = por %p100, %p101
      %p103 = scmp.ne.s32.totalorder %s94, %s95
      %p104 = scmp.eq.s32.totalorder %s21, 0
      %p105 = por %p103, %p104
      %p106 = scmp.ne.s32.totalorder %s94, %s95
      %p107 = scmp.eq.s32.totalorder %s22, 7
      %p108 = por %p106, %p107
      %p110 = scmp.ne.s32.totalorder %s95, %s109
      %p111 = scmp.eq.s32.totalorder %s22, 0
      %p112 = por %p110, %p111
      %s114 = sadd.s32 %s113, 1
      %p117 = scmp.eq.s32.totalorder %s16, 7
      %p118 = scmp.ne.s32.totalorder %s113, %s115
      %p119 = scmp.eq.s32.totalorder %s16, 0
      %p120 = por %p118, %p119
      %p121 = scmp.ne.s32.totalorder %s113, %s115
      %p122 = scmp.eq.s32.totalorder %s21, 7
      %p123 = por %p121, %p122
      %p124 = scmp.ne.s32.totalorder %s115, %s116
      %p125 = scmp.eq.s32.totalorder %s21, 0
      %p126 = por %p124, %p125
      %p127 = scmp.ne.s32.totalorder %s115, %s116
      %p128 = scmp.eq.s32.totalorder %s22, 7
      %p129 = por %p127, %p128
      %p131 = scmp.ne.s32.totalorder %s116, %s130
      %p132 = scmp.eq.s32.totalorder %s22, 0
      %p133 = por %p131, %p132
      %s135 = sadd.s32 %s134, 1
      %p138 = scmp.eq.s32.totalorder %s16, 7
      %p139 = scmp.ne.s32.totalorder %s134, %s136
      %p140 = scmp.eq.s32.totalorder %s16, 0
      %p141 = por %p139, %p140
      %p142 = scmp.ne.s32.totalorder %s134, %s136
      %p143 = scmp.eq.s32.totalorder %s21, 7
      %p144 = por %p142, %p143
      %p145 = scmp.ne.s32.totalorder %s136, %s137
      %p146 = scmp.eq.s32.totalorder %s21, 0
      %p147 = por %p145, %p146
      %p148 = scmp.ne.s32.totalorder %s136, %s137
      %p149 = scmp.eq.s32.totalorder %s22, 7
      %p150 = por %p148, %p149
      %p152 = scmp.ne.s32.totalorder %s137, %s151
      %p153 = scmp.eq.s32.totalorder %s22, 0
      %p154 = por %p152, %p153
      %s156 = sadd.s32 %s155, 1
      %p159 = scmp.eq.s32.totalorder %s16, 7
      %p160 = scmp.ne.s32.totalorder %s155, %s157
      %p161 = scmp.eq.s32.totalorder %s16, 0
      %p162 = por %p160, %p161
      %p163 = scmp.ne.s32.totalorder %s155, %s157
      %p164 = scmp.eq.s32.totalorder %s21, 7
      %p165 = por %p163, %p164
      %p166 = scmp.ne.s32.totalorder %s157, %s158
      %p167 = scmp.eq.s32.totalorder %s21, 0
      %p168 = por %p166, %p167
      %p169 = scmp.ne.s32.totalorder %s157, %s158
      %p170 = scmp.eq.s32.totalorder %s22, 7
      %p171 = por %p169, %p170
      %p173 = scmp.ne.s32.totalorder %s158, %s172
      %p174 = scmp.eq.s32.totalorder %s22, 0
      %p175 = por %p173, %p174
      %s176 = ssub.s32 %s16, %s23
      %p177 = scmp.eq.s32.totalorder %s176, 0
      %s179 = sadd.s32 %s178, 1
      %s180 = scalar_select %p177, %s178, %s179
      %p183 = pneg %p177
      %p184 = scmp.eq.s32.totalorder %s16, 7
      %p185 = por %p183, %p184
      %p186 = scmp.ne.s32.totalorder %s178, %s181
      %p187 = scmp.eq.s32.totalorder %s16, 0
      %p188 = por %p186, %p187
      %p189 = scmp.ne.s32.totalorder %s178, %s181
      %p190 = scmp.eq.s32.totalorder %s21, 7
      %p191 = por %p189, %p190
      %p192 = scmp.ne.s32.totalorder %s181, %s182
      %p193 = scmp.eq.s32.totalorder %s21, 0
      %p194 = por %p192, %p193
      %p195 = scmp.ne.s32.totalorder %s181, %s182
      %p196 = scmp.eq.s32.totalorder %s22, 7
      %p197 = por %p195, %p196
      %p199 = scmp.ne.s32.totalorder %s182, %s198
      %p200 = scmp.eq.s32.totalorder %s22, 0
      %p201 = por %p199, %p200
      %p202 = scmp.le.s32.totalorder 1, %s16
      %p203 = scmp.lt.s32.totalorder %s16, 9
      %p204 = pnand %p202, %p203
      %p205 = pneg %p204
      // Predicated region
      $region9: #{pre_norm_feedforward.1} parent=5 // pred_check
        _
      $region10: #{pre_norm_feedforward.1} parent=5 // pred_check_branch
        %207 = sbr.rel (%p204) target = $region12
      $region11: #{pre_norm_feedforward.1} parent=5 // pred_region
        %s208 = ssub.s32 %s16, 1
        // Predicated region
        $region13: #{pre_norm_feedforward.1} parent=11 // pred_check
          %p209 = pneg %p63
        $region14: #{pre_norm_feedforward.1} parent=11 // pred_check_branch
          %211 = sbr.rel (%p209) target = $region16
        $region15: #{pre_norm_feedforward.1} parent=11 // pred_region
          _
        $region16: #{pre_norm_feedforward.1} parent=11 // pred_fallthru
          _
        // Predicated region
        $region17: #{pre_norm_feedforward.1} parent=11 // pred_check
          %p212 = pneg %p84
        $region18: #{pre_norm_feedforward.1} parent=11 // pred_check_branch
          %214 = sbr.rel (%p212) target = $region20
        $region19: #{pre_norm_feedforward.1} parent=11 // pred_region
          _
        $region20: #{pre_norm_feedforward.1} parent=11 // pred_fallthru
          _
        // Predicated region
        $region21: #{pre_norm_feedforward.1} parent=11 // pred_check
          %p215 = pneg %p105
        $region22: #{pre_norm_feedforward.1} parent=11 // pred_check_branch
          %217 = sbr.rel (%p215) target = $region24
        $region23: #{pre_norm_feedforward.1} parent=11 // pred_region
          _
        $region24: #{pre_norm_feedforward.1} parent=11 // pred_fallthru
          _
        // Predicated region
        $region25: #{pre_norm_feedforward.1} parent=11 // pred_check
          %p218 = pneg %p126
        $region26: #{pre_norm_feedforward.1} parent=11 // pred_check_branch
          %220 = sbr.rel (%p218) target = $region28
        $region27: #{pre_norm_feedforward.1} parent=11 // pred_region
          _
        $region28: #{pre_norm_feedforward.1} parent=11 // pred_fallthru
          _
        // Predicated region
        $region29: #{pre_norm_feedforward.1} parent=11 // pred_check
          %p221 = pneg %p147
        $region30: #{pre_norm_feedforward.1} parent=11 // pred_check_branch
          %223 = sbr.rel (%p221) target = $region32
        $region31: #{pre_norm_feedforward.1} parent=11 // pred_region
          _
        $region32: #{pre_norm_feedforward.1} parent=11 // pred_fallthru
          _
        // Predicated region
        $region33: #{pre_norm_feedforward.1} parent=11 // pred_check
          %p224 = pneg %p168
        $region34: #{pre_norm_feedforward.1} parent=11 // pred_check_branch
          %226 = sbr.rel (%p224) target = $region36
        $region35: #{pre_norm_feedforward.1} parent=11 // pred_region
          _
        $region36: #{pre_norm_feedforward.1} parent=11 // pred_fallthru
          _
      $region12: #{pre_norm_feedforward.1} parent=5 // pred_fallthru
        _
      %p227 = scmp.lt.s32.totalorder %s16, 8
      // Predicated region
      $region37: #{pre_norm_feedforward.1} parent=5 // pred_check
        %p228 = pneg %p227
      $region38: #{pre_norm_feedforward.1} parent=5 // pred_check_branch
        %230 = sbr.rel (%p228) target = $region40
      $region39: #{pre_norm_feedforward.1} parent=5 // pred_region
        // Predicated region
        $region41: #{pre_norm_feedforward.1} parent=39 // pred_check
          %p231 = pneg %p36
        $region42: #{pre_norm_feedforward.1} parent=39 // pred_check_branch
          %233 = sbr.rel (%p231) target = $region44
        $region43: #{pre_norm_feedforward.1} parent=39 // pred_region
          %s234 = smul.u32 2, %s16
          %p235 = scmp.lt.s32.totalorder %s234, 15
          %s236 = scalar_select %p235, %s234, 15
          %s237 = smul.addr %s236, 8
          %s238 = scalar_lea.vmem %s0, %s237
          %s239 = smul.u32 2, %s16
        $region44: #{pre_norm_feedforward.1} parent=39 // pred_fallthru
          _
      $region40: #{pre_norm_feedforward.1} parent=5 // pred_fallthru
        _
      %p240 = scmp.le.s32.totalorder 1, %s16
      %p241 = scmp.lt.s32.totalorder %s16, 9
      %p242 = pnand %p240, %p241
      %p243 = pneg %p242
      // Predicated region
      $region45: #{pre_norm_feedforward.1} parent=5 // pred_check
        _
      $region46: #{pre_norm_feedforward.1} parent=5 // pred_check_branch
        %245 = sbr.rel (%p242) target = $region48
      $region47: #{pre_norm_feedforward.1} parent=5 // pred_region
        %s246 = ssub.s32 %s16, 1
        %s247 = smul.u32 2, %s21
        %p248 = scmp.lt.s32.totalorder %s247, 15
        %s249 = scalar_select %p248, %s247, 15
        %s250 = smul.addr %s249, 8
        %s251 = scalar_lea.vmem %s0, %s250
        %p252 = pneg %p42
        %p253 = pneg %p39
        %p254 = pneg %p63
        %p255 = pneg %p60
        %p256 = pneg %p84
        %p257 = pneg %p81
        %p258 = pneg %p105
        %p259 = pneg %p102
        %p260 = pneg %p126
        %p261 = pneg %p123
        %p262 = pneg %p147
        %p263 = pneg %p144
        %p264 = pneg %p168
        %p265 = pneg %p165
        %p266 = pneg %p194
        %p267 = pneg %p191
        %s268 = sand.u32 %s181, 1
        %s269 = scalar_lea.sflag [#allocation3], %s268
        %s270 = sand.u32 %s181, 1
        %s271 = smul.addr %s270, 16
        %s272 = scalar_lea.vmem [#allocation2], %s271
        %s273 = smul.u32 2, %s21
        %p274 = scmp.lt.s32.totalorder %s273, 15
        %s275 = scalar_select %p274, %s273, 15
        %s276 = smul.addr %s275, 8
        %s277 = scalar_lea.vmem %s0, %s276
        %s278 = smul.u32 2, %s21
        %s279 = smul.u32 2, %s21
        %v281 = vld [vmem:[%s277] sm:$0xff]
        %v282 = vld [vmem:[%s277 + $0x8] sm:$0xff]
        %v283 = vld [vmem:[%s1] sm:$0x1]
        %v284 = vld [vmem:[%s2] sm:$0x1]
        %285 = vadd.xlane.f32.xlu0 %v281
        %v286 = vpop.xlane.xlu0 %285
        %287 = vadd.xlane.f32.xlu0 %v282
        %v288 = vpop.xlane.xlu0 %287
        %v289 = vrcp.pop 128.0
        %v290 = vmul.f32 %v286, %v289
        %v291 = vmul.f32 %v288, %v289
        %v292 = vmul.f32 %v281, %v281
        %v293 = vmul.f32 %v282, %v282
        %294 = vadd.xlane.f32.xlu0 %v292
        %v295 = vpop.xlane.xlu0 %294
        %296 = vadd.xlane.f32.xlu0 %v293
        %v297 = vpop.xlane.xlu0 %296
        %v298 = vmul.f32 %v295, %v289
        %v299 = vmul.f32 %v297, %v289
        %v300 = vmul.f32 %v290, %v290
        %v301 = vmul.f32 %v291, %v291
        %v302 = vsub.f32 %v298, %v300
        %v303 = vsub.f32 %v299, %v301
        %v304 = vmax.f32 %v302, 0.0
        %v305 = vmax.f32 %v303, 0.0
        %v306 = vsub.f32 %v281, %v290
        %v307 = vsub.f32 %v282, %v291
        %v308 = vadd.f32 %v304, 1e-05
        %v309 = vadd.f32 %v305, 1e-05
        %v310 = vrsqrt.pop %v308
        %v311 = vrsqrt.pop %v309
        %v312 = vmul.f32 %v306, %v310
        %v313 = vmul.f32 %v307, %v311
        %v315 = vlaneseq
        %v316 = vshrl.u32 %v315, 7
        %v317 = vsub.s32 0, %v316
        %v318 = vrot.slane %v283, %v317
        %v320 = vmul.f32 %v312, %v318
        %v321 = vmul.f32 %v313, %v318
        %v323 = vlaneseq
        %v324 = vshrl.u32 %v323, 7
        %v325 = vsub.s32 0, %v324
        %v326 = vrot.slane %v284, %v325
        %v328 = vadd.f32 %v320, %v326
        %v329 = vadd.f32 %v321, %v326
        %v330 = vpack.c.bf16 %v329, %v328
        %v331 = vld [vmem:[%s3] sm:$0xff]
        %v332 = vld [vmem:[%s3 + $0x8] sm:$0xff]
        %v333 = vld [vmem:[%s3 + $0x10] sm:$0xff]
        %v334 = vld [vmem:[%s3 + $0x18] sm:$0xff]
        %v335 = vld [vmem:[%s3 + $0x20] sm:$0xff]
        %v336 = vld [vmem:[%s3 + $0x28] sm:$0xff]
        %v337 = vld [vmem:[%s3 + $0x30] sm:$0xff]
        %v338 = vld [vmem:[%s3 + $0x38] sm:$0xff]
        %v339 = vld [vmem:[%s3 + $0x40] sm:$0xff]
        %v340 = vld [vmem:[%s3 + $0x48] sm:$0xff]
        %v341 = vld [vmem:[%s3 + $0x50] sm:$0xff]
        %v342 = vld [vmem:[%s3 + $0x58] sm:$0xff]
        %v343 = vld [vmem:[%s3 + $0x60] sm:$0xff]
        %v344 = vld [vmem:[%s3 + $0x68] sm:$0xff]
        %v345 = vld [vmem:[%s3 + $0x70] sm:$0xff]
        %v346 = vld [vmem:[%s3 + $0x78] sm:$0xff]
        %v347 = vld [vmem:[%s4] sm:$0x3]
        %v349 = vlaneseq
        %v350 = vshrl.u32 %v349, 7
        %v351 = vsub.s32 0, %v350
        %v352 = vrot.slane %v347, %v351
        %v353 = vlaneseq
        %v354 = vshrl.u32 %v353, 7
        %v355 = vsub.s32 1, %v354
        %v356 = vrot.slane %v347, %v355
        %v375 = vunpack.c.l.b16 %v331
        %v376 = vunpack.c.h.b16 %v331
        %v377 = vunpack.c.l.b16 %v332
        %v378 = vunpack.c.h.b16 %v332
        %v379 = vunpack.c.l.b16 %v333
        %v380 = vunpack.c.h.b16 %v333
        %v381 = vunpack.c.l.b16 %v334
        %v382 = vunpack.c.h.b16 %v334
        %v383 = vunpack.c.l.b16 %v335
        %v384 = vunpack.c.h.b16 %v335
        %v385 = vunpack.c.l.b16 %v336
        %v386 = vunpack.c.h.b16 %v336
        %v387 = vunpack.c.l.b16 %v337
        %v388 = vunpack.c.h.b16 %v337
        %v389 = vunpack.c.l.b16 %v338
        %v390 = vunpack.c.h.b16 %v338
        %v391 = vunpack.c.l.b16 %v339
        %v392 = vunpack.c.h.b16 %v339
        %v393 = vunpack.c.l.b16 %v340
        %v394 = vunpack.c.h.b16 %v340
        %v395 = vunpack.c.l.b16 %v341
        %v396 = vunpack.c.h.b16 %v341
        %v397 = vunpack.c.l.b16 %v342
        %v398 = vunpack.c.h.b16 %v342
        %v399 = vunpack.c.l.b16 %v343
        %v400 = vunpack.c.h.b16 %v343
        %v401 = vunpack.c.l.b16 %v344
        %v402 = vunpack.c.h.b16 %v344
        %v403 = vunpack.c.l.b16 %v345
        %v404 = vunpack.c.h.b16 %v345
        %v405 = vunpack.c.l.b16 %v346
        %v406 = vunpack.c.h.b16 %v346
        %v407 = vpack.c.b16 %v377, %v375
        %v408 = vpack.c.b16 %v378, %v376
        %v409 = vpack.c.b16 %v381, %v379
        %v410 = vpack.c.b16 %v382, %v380
        %v411 = vpack.c.b16 %v385, %v383
        %v412 = vpack.c.b16 %v386, %v384
        %v413 = vpack.c.b16 %v389, %v387
        %v414 = vpack.c.b16 %v390, %v388
        %v415 = vpack.c.b16 %v393, %v391
        %v416 = vpack.c.b16 %v394, %v392
        %v417 = vpack.c.b16 %v397, %v395
        %v418 = vpack.c.b16 %v398, %v396
        %v419 = vpack.c.b16 %v401, %v399
        %v420 = vpack.c.b16 %v402, %v400
        %v421 = vpack.c.b16 %v405, %v403
        %v422 = vpack.c.b16 %v406, %v404
        %439 = vmatprep.subr.bf16.mxu0 %v422
        %440 = vmatpush1.bf16.msra.mxu0 %v421
        %441 = vmatprep.subr.bf16.mxu0 %v420
        %442 = vmatpush1.bf16.msra.mxu0 %v419
        %443 = vmatprep.subr.bf16.mxu0 %v418
        %444 = vmatpush1.bf16.msra.mxu0 %v417
        %445 = vmatprep.subr.bf16.mxu0 %v416
        %446 = vmatpush1.bf16.msra.mxu0 %v415
        %447 = vmatprep.subr.bf16.mxu0 %v414
        %448 = vmatpush1.bf16.msra.mxu0 %v413
        %449 = vmatprep.subr.bf16.mxu0 %v412
        %450 = vmatpush1.bf16.msra.mxu0 %v411
        %451 = vmatprep.subr.bf16.mxu0 %v410
        %452 = vmatpush1.bf16.msra.mxu0 %v409
        %453 = vmatprep.subr.bf16.mxu0 %v408
        %454 = vmatpush1.bf16.msra.mxu0 %v407
        %455 = vmatprep.subr.bf16.mxu0 0
        %456 = vmatpush2.bf16.msra.mxu0 0
        %457 = vmatprep.subr.bf16.mxu0 0
        %458 = vmatpush2.bf16.msra.mxu0 0
        %459 = vmatprep.subr.bf16.mxu0 0
        %460 = vmatpush2.bf16.msra.mxu0 0
        %461 = vmatprep.subr.bf16.mxu0 0
        %462 = vmatpush2.bf16.msra.mxu0 0
        %463 = vmatprep.subr.bf16.mxu0 0
        %464 = vmatpush2.bf16.msra.mxu0 0
        %465 = vmatprep.subr.bf16.mxu0 0
        %466 = vmatpush2.bf16.msra.mxu0 0
        %467 = vmatprep.subr.bf16.mxu0 0
        %468 = vmatpush2.bf16.msra.mxu0 0
        %469 = vmatprep.subr.bf16.mxu0 0
        %470 = vmatpush2.bf16.msra.mxu0 0
        %471 = vmatprep.mubr.bf16.mxu0 0
        %472 = vmatmul.mubr.bf16.gmra.mxu0 %v330
        %v473 = vpop.f32.mrf.mxu0
        %v474 = vadd.f32 %v352, %v473
        %v475 = vpop.f32.mrf.mxu0
        %v476 = vadd.f32 %v356, %v475
        %v477 = vpop.f32.mrf.mxu0
        %v478 = vadd.f32 %v352, %v477
        %v479 = vpop.f32.mrf.mxu0
        %v480 = vadd.f32 %v356, %v479
        %481 = vdwg.mxu0
        %v482 = vmul.f32 %v474, 0.5
        %v483 = vmul.f32 %v476, 0.5
        %v484 = vmul.f32 %v478, 0.5
        %v485 = vmul.f32 %v480, 0.5
        %v486 = vmul.f32 %v474, 0.044715
        %v487 = vmul.f32 %v476, 0.044715
        %v488 = vmul.f32 %v478, 0.044715
        %v489 = vmul.f32 %v480, 0.044715
        %v490 = vmul.f32 %v486, %v474
        %v491 = vmul.f32 %v487, %v476
        %v492 = vmul.f32 %v488, %v478
        %v493 = vmul.f32 %v489, %v480
        %v494 = vmul.f32 %v490, %v474
        %v495 = vmul.f32 %v491, %v476
        %v496 = vmul.f32 %v492, %v478
        %v497 = vmul.f32 %v493, %v480
        %v498 = vadd.f32 %v474, %v494
        %v499 = vadd.f32 %v476, %v495
        %v500 = vadd.f32 %v478, %v496
        %v501 = vadd.f32 %v480, %v497
        %v502 = vmul.f32 %v498, 0.7978846
        %v503 = vmul.f32 %v499, 0.7978846
        %v504 = vmul.f32 %v500, 0.7978846
        %v505 = vmul.f32 %v501, 0.7978846
        %v506 = vtanh.pop %v502
        %v507 = vtanh.pop %v503
        %v508 = vtanh.pop %v504
        %v509 = vtanh.pop %v505
        %v510 = vadd.f32 %v506, 1.0
        %v511 = vadd.f32 %v507, 1.0
        %v512 = vadd.f32 %v508, 1.0
        %v513 = vadd.f32 %v509, 1.0
        %v514 = vmul.f32 %v482, %v510
        %v515 = vmul.f32 %v483, %v511
        %v516 = vmul.f32 %v484, %v512
        %v517 = vmul.f32 %v485, %v513
        %v518 = vpack.c.bf16 %v516, %v514
        %v519 = vpack.c.bf16 %v517, %v515
        %v520 = vld [vmem:[%s5] sm:$0xf]
        %v521 = vld [vmem:[%s5 + $0x4] sm:$0xf]
        %v522 = vld [vmem:[%s5 + $0x8] sm:$0xf]
        %v523 = vld [vmem:[%s5 + $0xc] sm:$0xf]
        %v524 = vld [vmem:[%s5 + $0x10] sm:$0xf]
        %v525 = vld [vmem:[%s5 + $0x14] sm:$0xf]
        %v526 = vld [vmem:[%s5 + $0x18] sm:$0xf]
        %v527 = vld [vmem:[%s5 + $0x1c] sm:$0xf]
        %v528 = vld [vmem:[%s5 + $0x20] sm:$0xf]
        %v529 = vld [vmem:[%s5 + $0x24] sm:$0xf]
        %v530 = vld [vmem:[%s5 + $0x28] sm:$0xf]
        %v531 = vld [vmem:[%s5 + $0x2c] sm:$0xf]
        %v532 = vld [vmem:[%s5 + $0x30] sm:$0xf]
        %v533 = vld [vmem:[%s5 + $0x34] sm:$0xf]
        %v534 = vld [vmem:[%s5 + $0x38] sm:$0xf]
        %v535 = vld [vmem:[%s5 + $0x3c] sm:$0xf]
        %v536 = vld [vmem:[%s5 + $0x40] sm:$0xf]
        %v537 = vld [vmem:[%s5 + $0x44] sm:$0xf]
        %v538 = vld [vmem:[%s5 + $0x48] sm:$0xf]
        %v539 = vld [vmem:[%s5 + $0x4c] sm:$0xf]
        %v540 = vld [vmem:[%s5 + $0x50] sm:$0xf]
        %v541 = vld [vmem:[%s5 + $0x54] sm:$0xf]
        %v542 = vld [vmem:[%s5 + $0x58] sm:$0xf]
        %v543 = vld [vmem:[%s5 + $0x5c] sm:$0xf]
        %v544 = vld [vmem:[%s5 + $0x60] sm:$0xf]
        %v545 = vld [vmem:[%s5 + $0x64] sm:$0xf]
        %v546 = vld [vmem:[%s5 + $0x68] sm:$0xf]
        %v547 = vld [vmem:[%s5 + $0x6c] sm:$0xf]
        %v548 = vld [vmem:[%s5 + $0x70] sm:$0xf]
        %v549 = vld [vmem:[%s5 + $0x74] sm:$0xf]
        %v550 = vld [vmem:[%s5 + $0x78] sm:$0xf]
        %v551 = vld [vmem:[%s5 + $0x7c] sm:$0xf]
        %v552 = vld [vmem:[%s6] sm:$0x1]
        %v554 = vlaneseq
        %v555 = vshrl.u32 %v554, 7
        %v556 = vsub.s32 0, %v555
        %v557 = vrot.slane %v552, %v556
        %v591 = vunpack.c.l.b16 %v520
        %v592 = vunpack.c.l.b16 %v521
        %v593 = vunpack.c.l.b16 %v522
        %v594 = vunpack.c.l.b16 %v523
        %v595 = vunpack.c.l.b16 %v524
        %v596 = vunpack.c.l.b16 %v525
        %v597 = vunpack.c.l.b16 %v526
        %v598 = vunpack.c.l.b16 %v527
        %v599 = vunpack.c.l.b16 %v528
        %v600 = vunpack.c.l.b16 %v529
        %v601 = vunpack.c.l.b16 %v530
        %v602 = vunpack.c.l.b16 %v531
        %v603 = vunpack.c.l.b16 %v532
        %v604 = vunpack.c.l.b16 %v533
        %v605 = vunpack.c.l.b16 %v534
        %v606 = vunpack.c.l.b16 %v535
        %v607 = vunpack.c.l.b16 %v536
        %v608 = vunpack.c.l.b16 %v537
        %v609 = vunpack.c.l.b16 %v538
        %v610 = vunpack.c.l.b16 %v539
        %v611 = vunpack.c.l.b16 %v540
        %v612 = vunpack.c.l.b16 %v541
        %v613 = vunpack.c.l.b16 %v542
        %v614 = vunpack.c.l.b16 %v543
        %v615 = vunpack.c.l.b16 %v544
        %v616 = vunpack.c.l.b16 %v545
        %v617 = vunpack.c.l.b16 %v546
        %v618 = vunpack.c.l.b16 %v547
        %v619 = vunpack.c.l.b16 %v548
        %v620 = vunpack.c.l.b16 %v549
        %v621 = vunpack.c.l.b16 %v550
        %v622 = vunpack.c.l.b16 %v551
        %v623 = vpack.c.b16 %v592, %v591
        %v624 = vpack.c.b16 %v594, %v593
        %v625 = vpack.c.b16 %v596, %v595
        %v626 = vpack.c.b16 %v598, %v597
        %v627 = vpack.c.b16 %v600, %v599
        %v628 = vpack.c.b16 %v602, %v601
        %v629 = vpack.c.b16 %v604, %v603
        %v630 = vpack.c.b16 %v606, %v605
        %v631 = vpack.c.b16 %v608, %v607
        %v632 = vpack.c.b16 %v610, %v609
        %v633 = vpack.c.b16 %v612, %v611
        %v634 = vpack.c.b16 %v614, %v613
        %v635 = vpack.c.b16 %v616, %v615
        %v636 = vpack.c.b16 %v618, %v617
        %v637 = vpack.c.b16 %v620, %v619
        %v638 = vpack.c.b16 %v622, %v621
        %655 = vmatprep.subr.bf16.mxu0 0
        %656 = vmatpush1.bf16.msra.mxu0 %v630
        %657 = vmatprep.subr.bf16.mxu0 0
        %658 = vmatpush1.bf16.msra.mxu0 %v629
        %659 = vmatprep.subr.bf16.mxu0 0
        %660 = vmatpush1.bf16.msra.mxu0 %v628
        %661 = vmatprep.subr.bf16.mxu0 0
        %662 = vmatpush1.bf16.msra.mxu0 %v627
        %663 = vmatprep.subr.bf16.mxu0 0
        %664 = vmatpush1.bf16.msra.mxu0 %v626
        %665 = vmatprep.subr.bf16.mxu0 0
        %666 = vmatpush1.bf16.msra.mxu0 %v625
        %667 = vmatprep.subr.bf16.mxu0 0
        %668 = vmatpush1.bf16.msra.mxu0 %v624
        %669 = vmatprep.subr.bf16.mxu0 0
        %670 = vmatpush1.bf16.msra.mxu0 %v623
        %671 = vmatprep.subr.bf16.mxu0 0
        %672 = vmatpush2.bf16.msra.mxu0 %v638
        %673 = vmatprep.subr.bf16.mxu0 0
        %674 = vmatpush2.bf16.msra.mxu0 %v637
        %675 = vmatprep.subr.bf16.mxu0 0
        %676 = vmatpush2.bf16.msra.mxu0 %v636
        %677 = vmatprep.subr.bf16.mxu0 0
        %678 = vmatpush2.bf16.msra.mxu0 %v635
        %679 = vmatprep.subr.bf16.mxu0 0
        %680 = vmatpush2.bf16.msra.mxu0 %v634
        %681 = vmatprep.subr.bf16.mxu0 0
        %682 = vmatpush2.bf16.msra.mxu0 %v633
        %683 = vmatprep.subr.bf16.mxu0 0
        %684 = vmatpush2.bf16.msra.mxu0 %v632
        %685 = vmatprep.subr.bf16.mxu0 0
        %686 = vmatpush2.bf16.msra.mxu0 %v631
        %687 = vmatprep.mubr.bf16.mxu0 %v519
        %688 = vmatmul.mubr.bf16.gmra.mxu0 %v518
        %v689 = vpop.f32.mrf.mxu0
        %v690 = vadd.f32 %v557, %v689
        %v691 = vpop.f32.mrf.mxu0
        %v692 = vpop.f32.mrf.mxu0
        %v693 = vadd.f32 %v557, %v692
        %v694 = vpop.f32.mrf.mxu0
        %695 = vdwg.mxu0
        %696 = vst [vmem:[%s272] sm:$0xff] %v690
        %697 = vst [vmem:[%s272 + $0x8] sm:$0xff] %v693
        %s698 = sand.u32 %s181, 1
        %s699 = scalar_lea.sflag [#allocation3], %s698
        %s700 = sand.u32 %s181, 1
        %s701 = smul.addr %s700, 16
        %s702 = scalar_lea.vmem [#allocation2], %s701
        // Predicated region
        $region49: #{pre_norm_feedforward.1} parent=47 // pred_check
          %p703 = pneg %p191
        $region50: #{pre_norm_feedforward.1} parent=47 // pred_check_branch
          %705 = sbr.rel (%p703) target = $region52
        $region51: #{pre_norm_feedforward.1} parent=47 // pred_region
          %s706 = smul.u32 2, %s21
          %s708 = ssub.s32 256, 256
          %709 = vsyncadd %s699, %s708
          %s710 = smul.addr %s706, 128
          %s711 = scalar_lea.hbm %s7, %s710
          %s712 = sshll.u32 %s702, 4
          %s713 = int_to_ptr.vmem [resolvable:$true] %s712
          %718 = dma.vmem_to_hbm [thread:$0]  %s713, 256, %s711, %s699, 128, 128, 8
        $region52: #{pre_norm_feedforward.1} parent=47 // pred_fallthru
          _
      $region48: #{pre_norm_feedforward.1} parent=5 // pred_fallthru
        _
      %p719 = scmp.le.s32.totalorder 2, %s16
      // Predicated region
      $region53: #{pre_norm_feedforward.1} parent=5 // pred_check
        %p720 = pneg %p719
      $region54: #{pre_norm_feedforward.1} parent=5 // pred_check_branch
        %722 = sbr.rel (%p720) target = $region56
      $region55: #{pre_norm_feedforward.1} parent=5 // pred_region
        %s723 = ssub.s32 %s16, 2
        // Predicated region
        $region57: #{pre_norm_feedforward.1} parent=55 // pred_check
          %p724 = pneg %p197
        $region58: #{pre_norm_feedforward.1} parent=55 // pred_check_branch
          %726 = sbr.rel (%p724) target = $region60
        $region59: #{pre_norm_feedforward.1} parent=55 // pred_region
          %s727 = sand.u32 %s182, 1
          %s728 = scalar_lea.sflag [#allocation3], %s727
          %s729 = sand.u32 %s182, 1
          %s730 = smul.addr %s729, 16
          %s731 = scalar_lea.vmem [#allocation2], %s730
          %732 = dma.done %s728, 256
        $region60: #{pre_norm_feedforward.1} parent=55 // pred_fallthru
          _
      $region56: #{pre_norm_feedforward.1} parent=5 // pred_fallthru
        _
    $region6: #{pre_norm_feedforward.1} parent=1 // loop_footer
      %s20 = sadd.s32 1, %s16
    $region7: #{pre_norm_feedforward.1} parent=1 // loop_footer_branch
      %15 = sbr.rel target = $region3
    $region8: #{pre_norm_feedforward.1} parent=1 // loop_exit
      _
    %733 = vsyncpa [#allocation3], 1
    %s734 = scalar_lea.sflag [#allocation3], 1
    %735 = vsyncpa %s734, 1

</llo_original>
